<compile_context>
chip_gen: v6e
topology: v6e:2x2x1
jax: 0.10.0
libtpu: 0.0.40
codegen_flags: <defaults>
</compile_context>

<pallas_src>
import functools
import math

import jax
import jax.numpy as jnp
from jax.experimental import pallas as pl
from jax.experimental.pallas import tpu as pltpu

POOLING_R = 4
_VMEM_LIMIT = 32 * 1024 * 1024


# ---------------------------------------------------------------------------
# In-kernel helpers
# ---------------------------------------------------------------------------
def _conv3x3_flat(x, w_mat, bias, H, W):
    """3x3 same-padded conv on a channels-major, spatially-flattened VMEM tile.

    x     : (Cin, P) float32, P = H*W row-major.
    w_mat : (Cout, 9*Cin) bfloat16, taps packed (kh, kw)-row-major.
    bias  : (Cout, 1) float32 (conv bias with BN folded in).
    Returns (Cout, P) float32.

    Each tap is a lane shift of the resident tile (slice + zero fill); the
    left/right image border is masked, the top/bottom border is handled by the
    zero fill.  All 9 taps are concatenated along the contraction axis so the
    whole conv is a single MXU matmul (contraction = 9*Cin).
    """
    Cin, P = x.shape
    lane = jax.lax.broadcasted_iota(jnp.int32, (Cin, P), 1)
    wcol = (lane & (W - 1)) if (W & (W - 1)) == 0 else (lane % W)
    zero = jnp.float32(0.0)
    taps = []
    for dh in (-1, 0, 1):
        for dw in (-1, 0, 1):
            s = dh * W + dw
            if s == 0:
                t = x
            elif s > 0:
                t = jnp.concatenate([x[:, s:], jnp.zeros((Cin, s), x.dtype)], axis=1)
            else:
                t = jnp.concatenate([jnp.zeros((Cin, -s), x.dtype), x[:, :P + s]], axis=1)
            if dw == -1:
                t = jnp.where(wcol >= 1, t, zero)
            elif dw == 1:
                t = jnp.where(wcol <= W - 2, t, zero)
            taps.append(t)
    tap_cat = jnp.concatenate(taps, axis=0).astype(jnp.bfloat16)        # (9*Cin, P)
    out = jnp.dot(w_mat, tap_cat, preferred_element_type=jnp.float32)   # 1 MXU push
    return out + bias


# ---------------------------------------------------------------------------
# Kernels
# ---------------------------------------------------------------------------
def _down_kernel(taps_ref, w_ref, b_ref, o_ref):
    """down_layer: single matmul over channel-concatenated stride-2 taps + ReLU."""
    acc = jnp.dot(w_ref[...], taps_ref[...], preferred_element_type=jnp.float32)
    o_ref[...] = jnp.maximum(acc + b_ref[...], 0.0)


def _block_kernel(H, W, Hp, Wp,
                  x_ref,
                  w1a_ref, b1a_ref, w1b_ref, b1b_ref,
                  wk1_ref, bk1_ref, wk2_ref, bk2_ref,
                  wk3_ref, bk3_ref, wk4_ref, bk4_ref,
                  w3_ref, b3_ref, pool_ref, up_ref,
                  o_ref):
    """One fully fused SCBottleneck (inference-mode BN folded into the convs)."""
    x = x_ref[...]                                           # (C, P) f32 in VMEM
    xb = x.astype(jnp.bfloat16)

    # conv1_a / conv1_b (1x1, BN folded) + ReLU
    out_a = jnp.maximum(
        jnp.dot(w1a_ref[...], xb, preferred_element_type=jnp.float32) + b1a_ref[...], 0.0)
    out_b = jnp.maximum(
        jnp.dot(w1b_ref[...], xb, preferred_element_type=jnp.float32) + b1b_ref[...], 0.0)

    # branch a: k1 (conv3x3 + BN) then the bottleneck's ReLU
    out_a = jnp.maximum(_conv3x3_flat(out_a, wk1_ref[...], bk1_ref[...], H, W), 0.0)

    # branch b: SCConv entirely in VMEM.
    # k2: AvgPool(r) expressed as a tiny matmul with a constant (P, Hp*Wp) matrix.
    pooled = jnp.dot(out_b.astype(jnp.bfloat16), pool_ref[...],
                     preferred_element_type=jnp.float32)      # (gw, Hp*Wp)
    y2 = _conv3x3_flat(pooled, wk2_ref[...], bk2_ref[...], Hp, Wp)
    # nearest upsample back to (H, W) = matmul with constant 0/1 replication matrix
    up = jnp.dot(y2.astype(jnp.bfloat16), up_ref[...],
                 preferred_element_type=jnp.float32)          # (gw, P)
    # k3
    y3 = _conv3x3_flat(out_b, wk3_ref[...], bk3_ref[...], H, W)
    # out = k3(x) * sigmoid(identity + upsample(k2(x)) + 1e-8)
    gate = 1.0 / (1.0 + jnp.exp(-(out_b + up + 1e-8)))
    prod = y3 * gate
    # k4 (+ the bottleneck's outer ReLU)
    out_b = jnp.maximum(_conv3x3_flat(prod, wk4_ref[...], bk4_ref[...], H, W), 0.0)

    # conv3(cat) + bn3 + residual + ReLU
    cat = jnp.concatenate([out_a, out_b], axis=0).astype(jnp.bfloat16)   # (2*gw, P)
    out = jnp.dot(w3_ref[...], cat, preferred_element_type=jnp.float32) + b3_ref[...] + x
    o_ref[...] = jnp.maximum(out, 0.0)


# ---------------------------------------------------------------------------
# pallas_call wrappers
# ---------------------------------------------------------------------------
def _down_conv(x_nchw, w_pk, b_col):
    """3x3 / stride-2 / pad-1 conv + ReLU. Stride-2 taps are concatenated along
    channels in the wrapper (bf16) so the kernel is a single lane-dense matmul."""
    N, C, H, W = x_nchw.shape
    Ho, Wo = (H + 1) // 2, (W + 1) // 2
    P = Ho * Wo
    Cout = w_pk.shape[0]
    xp = jnp.pad(x_nchw, ((0, 0), (0, 0), (1, 1), (1, 1)))
    taps = jnp.concatenate(
        [xp[:, :, kh::2, kw::2][:, :, :Ho, :Wo] for kh in range(3) for kw in range(3)],
        axis=1).reshape(N, 9 * C, P).astype(jnp.bfloat16)

    out = pl.pallas_call(
        _down_kernel,
        out_shape=jax.ShapeDtypeStruct((N, Cout, P), jnp.float32),
        grid=(N,),
        in_specs=[pl.BlockSpec((None, 9 * C, P), lambda n: (n, 0, 0)),
                  pl.BlockSpec((Cout, 9 * C), lambda n: (0, 0)),
                  pl.BlockSpec((Cout, 1), lambda n: (0, 0))],
        out_specs=pl.BlockSpec((None, Cout, P), lambda n: (n, 0, 0)),
        compiler_params=pltpu.CompilerParams(
            dimension_semantics=("parallel",), vmem_limit_bytes=_VMEM_LIMIT),
        cost_estimate=pl.CostEstimate(
            flops=2 * N * Cout * 9 * C * P, transcendentals=0,
            bytes_accessed=int(taps.size) * 2 + int(w_pk.size) * 2 + N * Cout * P * 4),
    )(taps, w_pk, b_col)
    return out, Ho, Wo


def _scbottleneck(x, packed, pool_mat, up_mat, H, W, Hp, Wp):
    """One fused SCBottleneck pallas_call over the batch grid."""
    N, C, P = x.shape
    gw = C // 2
    weight_args = list(packed) + [pool_mat, up_mat]
    in_specs = [pl.BlockSpec((None, C, P), lambda n: (n, 0, 0))]
    in_specs += [pl.BlockSpec(a.shape, lambda n: (0, 0)) for a in weight_args]

    c3 = 2 * gw * 9 * gw
    flops = N * (2 * (2 * gw * C * P)                 # two 1x1 convs
                 + 3 * c3 * P + c3 * Hp * Wp          # k1, k3, k4 + k2
                 + 2 * 2 * gw * P * Hp * Wp           # pool + upsample matmuls
                 + 2 * C * 2 * gw * P)                # conv3
    bytes_accessed = (int(x.size) * 4 * 2
                      + sum(int(a.size) * a.dtype.itemsize for a in weight_args))

    return pl.pallas_call(
        functools.partial(_block_kernel, H, W, Hp, Wp),
        out_shape=jax.ShapeDtypeStruct((N, C, P), jnp.float32),
        grid=(N,),
        in_specs=in_specs,
        out_specs=pl.BlockSpec((None, C, P), lambda n: (n, 0, 0)),
        input_output_aliases={0: 0},   # residual block updates the activation in place
        compiler_params=pltpu.CompilerParams(
            dimension_semantics=("parallel",), vmem_limit_bytes=_VMEM_LIMIT),
        cost_estimate=pl.CostEstimate(flops=int(flops), transcendentals=N * gw * P,
                                      bytes_accessed=int(bytes_accessed)),
    )(x, *weight_args)


def _pool_mats(H, W, r):
    """Constant matrices: avg-pool (P, Hp*Wp) and nearest-upsample (Hp*Wp, P)."""
    Hp, Wp = H // r, W // r
    p = jnp.arange(H * W)
    q = ((p // W) // r) * Wp + (p % W) // r
    onehot = (q[:, None] == jnp.arange(Hp * Wp)[None, :]).astype(jnp.float32)
    pool = (onehot / float(r * r)).astype(jnp.bfloat16)
    up = onehot.T.astype(jnp.bfloat16)
    return pool, up


# ---------------------------------------------------------------------------
# Parameter init (deterministic, synthetic), BN folding, packing
# ---------------------------------------------------------------------------
def _fold_bn(w, b, bn, eps=1e-5):
    gamma, beta, mean, var = bn
    scale = gamma / jnp.sqrt(var + eps)
    return w * scale[:, None, None], (b - mean) * scale + beta


def _pack(w, b):
    cout = w.shape[0]
    return (w.reshape(cout, -1).astype(jnp.bfloat16),
            b.reshape(cout, 1).astype(jnp.float32))


def _init_conv(key, ksize, cin, cout, bias=True):
    k1, k2 = jax.random.split(key)
    fan_in = cin * ksize * ksize
    bound = 1.0 / math.sqrt(fan_in)
    w = jax.random.uniform(k1, (cout, ksize * ksize, cin), jnp.float32, -bound, bound)
    b = (jax.random.uniform(k2, (cout,), jnp.float32, -bound, bound)
         if bias else jnp.zeros((cout,), jnp.float32))
    return w, b


def _init_bn(key, c):
    k1, k2, k3, k4 = jax.random.split(key, 4)
    return (1.0 + 0.1 * jax.random.normal(k1, (c,), jnp.float32),
            0.1 * jax.random.normal(k2, (c,), jnp.float32),
            0.1 * jax.random.normal(k3, (c,), jnp.float32),
            jax.random.uniform(k4, (c,), jnp.float32, 0.5, 1.5))


def init_params(key, num_blocks, c):
    """Synthetic params, BN pre-folded (inference mode) and packed to the
    (Cout, K*Cin) bf16 layout the kernels consume."""
    n_blk = max(num_blocks - 1, 0)       # mirrors make_layer's range(1, num_blocks)
    keys = iter(jax.random.split(key, 2 + 14 * max(n_blk, 1)))
    gw = c // 2
    params = {"down": _pack(*_init_conv(next(keys), 3, c, c, bias=True)), "blocks": []}

    def conv_bn(ks, cin, cout, bias=True):
        w, b = _init_conv(next(keys), ks, cin, cout, bias=bias)
        return _pack(*_fold_bn(w, b, _init_bn(next(keys), cout)))

    for _ in range(n_blk):
        blk = (conv_bn(1, c, gw, bias=False)        # conv1_a + bn1_a
               + conv_bn(1, c, gw, bias=False)      # conv1_b + bn1_b
               + conv_bn(3, gw, gw)                 # k1
               + conv_bn(3, gw, gw)                 # k2
               + conv_bn(3, gw, gw)                 # k3
               + conv_bn(3, gw, gw)                 # k4
               + conv_bn(1, 2 * gw, c, bias=False)) # conv3 + bn3
        params["blocks"].append(blk)
    return params


# ---------------------------------------------------------------------------
# Forward (mirrors SCNET_DOWN -> SCBottleneck -> SCConv)
# ---------------------------------------------------------------------------
@jax.jit
def scnet_down_forward(params, spatial_features):
    x = spatial_features.astype(jnp.float32)                 # NCHW
    N, C, H, W = x.shape
    xf, Ho, Wo = _down_conv(x, *params["down"])               # (N, C, Ho*Wo)
    assert Ho % POOLING_R == 0 and Wo % POOLING_R == 0
    # TODO(synk): general shapes (non-divisible pooling / AvgPool floor semantics).
    pool_mat, up_mat = _pool_mats(Ho, Wo, POOLING_R)
    Hp, Wp = Ho // POOLING_R, Wo // POOLING_R
    for blk in params["blocks"]:
        xf = _scbottleneck(xf, blk, pool_mat, up_mat, Ho, Wo, Hp, Wp)
    return xf.reshape(N, C, Ho, Wo)                           # NCHW


if __name__ == "__main__":
    key = jax.random.PRNGKey(0)
    kx, kp = jax.random.split(key)
    N, C, H, W = 2, 8, 16, 16
    num_blocks = 2   # make_layer uses range(1, num_blocks) -> one SCBottleneck

    spatial_features = jax.random.normal(kx, (N, C, H, W), jnp.float32)  # NCHW
    params = init_params(kp, num_blocks, C)

    out = scnet_down_forward(params, spatial_features)
    jax.block_until_ready(out)
    assert out.shape == (N, C, H // 2, W // 2), out.shape
    assert bool(jnp.all(jnp.isfinite(out)))
    print("KERNEL_OK")
</pallas_src>

<mosaic_0001>
module attributes {stable_mosaic.version = 11 : i64} {
  func.func @_down_kernel(%arg0: i32, %arg1: memref<1x72x64xbf16, #tpu.memory_space<vmem>>, %arg2: memref<8x72xbf16, #tpu.memory_space<vmem>>, %arg3: memref<8x1xf32, #tpu.memory_space<vmem>>, %arg4: memref<1x8x64xf32, #tpu.memory_space<vmem>>) attributes {dimension_semantics = [#tpu.dimension_semantics<parallel>], iteration_bounds = array<i64: 2>, scalar_prefetch = 0 : i64, scratch_operands = 0 : i64, tpu.core_type = #tpu.core_type<tc>, window_params = [{transform_indices = @transform_0, window_bounds = array<i64: 1, 72, 64>}, {pipeline_mode = #tpu.pipeline_mode<synchronous>, transform_indices = @transform_1, window_bounds = array<i64: 8, 72>}, {pipeline_mode = #tpu.pipeline_mode<synchronous>, transform_indices = @transform_2, window_bounds = array<i64: 8, 1>}, {transform_indices = @transform_3, window_bounds = array<i64: 1, 8, 64>}]} {
    %c0 = arith.constant 0 : index
    %c0_0 = arith.constant 0 : index
    %0 = vector.load %arg2[%c0, %c0_0] : memref<8x72xbf16, #tpu.memory_space<vmem>>, vector<8x72xbf16>
    %c0_1 = arith.constant 0 : index
    %c0_2 = arith.constant 0 : index
    %c0_3 = arith.constant 0 : index
    %1 = vector.load %arg1[%c0_1, %c0_2, %c0_3] : memref<1x72x64xbf16, #tpu.memory_space<vmem>>, vector<1x72x64xbf16>
    %2 = vector.shape_cast %1 : vector<1x72x64xbf16> to vector<72x64xbf16>
    %cst = arith.constant dense<0.000000e+00> : vector<8x64xf32>
    %3 = tpu.matmul %0, %2, %cst {dimension_numbers = #tpu.dot_dimension_numbers<[1], [0], [0], [1], [0, 0, 1, 1], [], []>} : vector<8x72xbf16>, vector<72x64xbf16>, vector<8x64xf32> -> vector<8x64xf32>
    %c0_4 = arith.constant 0 : index
    %c0_5 = arith.constant 0 : index
    %4 = vector.load %arg3[%c0_4, %c0_5] : memref<8x1xf32, #tpu.memory_space<vmem>>, vector<8x1xf32>
    %5 = vector.broadcast %4 : vector<8x1xf32> to vector<8x64xf32>
    %6 = arith.addf %3, %5 : vector<8x64xf32>
    %cst_6 = arith.constant 0.000000e+00 : f32
    %7 = vector.broadcast %cst_6 : f32 to vector<8x64xf32>
    %8 = arith.maximumf %6, %7 : vector<8x64xf32>
    %c0_7 = arith.constant 0 : index
    %c0_8 = arith.constant 0 : index
    %c0_9 = arith.constant 0 : index
    %9 = vector.load %arg4[%c0_7, %c0_8, %c0_9] : memref<1x8x64xf32, #tpu.memory_space<vmem>>, vector<1x8x64xf32>
    %10 = vector.shape_cast %9 : vector<1x8x64xf32> to vector<8x64xf32>
    %11 = vector.shape_cast %8 : vector<8x64xf32> to vector<1x8x64xf32>
    tpu.vector_store %arg4[%c0_7, %c0_8, %c0_9], %11 {strides = array<i32>} : memref<1x8x64xf32, #tpu.memory_space<vmem>>, vector<1x8x64xf32>,
    return
  }
  func.func @transform_0(%arg0: i32) -> (i32, i32, i32) {
    %c0_i32 = arith.constant 0 : i32
    %c0_i32_0 = arith.constant 0 : i32
    %c0_i32_1 = arith.constant 0 : i32
    return %arg0, %c0_i32, %c0_i32_0 : i32, i32, i32
  }
  func.func @transform_1(%arg0: i32) -> (i32, i32) {
    %c0_i32 = arith.constant 0 : i32
    %c0_i32_0 = arith.constant 0 : i32
    %c0_i32_1 = arith.constant 0 : i32
    return %c0_i32, %c0_i32_0 : i32, i32
  }
  func.func @transform_2(%arg0: i32) -> (i32, i32) {
    %c0_i32 = arith.constant 0 : i32
    %c0_i32_0 = arith.constant 0 : i32
    %c0_i32_1 = arith.constant 0 : i32
    return %c0_i32, %c0_i32_0 : i32, i32
  }
  func.func @transform_3(%arg0: i32) -> (i32, i32, i32) {
    %c0_i32 = arith.constant 0 : i32
    %c0_i32_0 = arith.constant 0 : i32
    %c0_i32_1 = arith.constant 0 : i32
    return %arg0, %c0_i32, %c0_i32_0 : i32, i32, i32
  }
}

module attributes {stable_mosaic.version = 11 : i64} {
  func.func @_block_kernel(%arg0: i32, %arg1: memref<1x8x64xf32, #tpu.memory_space<vmem>>, %arg2: memref<4x8xbf16, #tpu.memory_space<vmem>>, %arg3: memref<4x1xf32, #tpu.memory_space<vmem>>, %arg4: memref<4x8xbf16, #tpu.memory_space<vmem>>, %arg5: memref<4x1xf32, #tpu.memory_space<vmem>>, %arg6: memref<4x36xbf16, #tpu.memory_space<vmem>>, %arg7: memref<4x1xf32, #tpu.memory_space<vmem>>, %arg8: memref<4x36xbf16, #tpu.memory_space<vmem>>, %arg9: memref<4x1xf32, #tpu.memory_space<vmem>>, %arg10: memref<4x36xbf16, #tpu.memory_space<vmem>>, %arg11: memref<4x1xf32, #tpu.memory_space<vmem>>, %arg12: memref<4x36xbf16, #tpu.memory_space<vmem>>, %arg13: memref<4x1xf32, #tpu.memory_space<vmem>>, %arg14: memref<8x8xbf16, #tpu.memory_space<vmem>>, %arg15: memref<8x1xf32, #tpu.memory_space<vmem>>, %arg16: memref<64x4xbf16, #tpu.memory_space<vmem>>, %arg17: memref<4x64xbf16, #tpu.memory_space<vmem>>, %arg18: memref<1x8x64xf32, #tpu.memory_space<vmem>>) attributes {dimension_semantics = [#tpu.dimension_semantics<parallel>], iteration_bounds = array<i64: 2>, scalar_prefetch = 0 : i64, scratch_operands = 0 : i64, tpu.core_type = #tpu.core_type<tc>, window_params = [{transform_indices = @transform_0, window_bounds = array<i64: 1, 8, 64>}, {pipeline_mode = #tpu.pipeline_mode<synchronous>, transform_indices = @transform_1, window_bounds = array<i64: 4, 8>}, {pipeline_mode = #tpu.pipeline_mode<synchronous>, transform_indices = @transform_2, window_bounds = array<i64: 4, 1>}, {pipeline_mode = #tpu.pipeline_mode<synchronous>, transform_indices = @transform_3, window_bounds = array<i64: 4, 8>}, {pipeline_mode = #tpu.pipeline_mode<synchronous>, transform_indices = @transform_4, window_bounds = array<i64: 4, 1>}, {pipeline_mode = #tpu.pipeline_mode<synchronous>, transform_indices = @transform_5, window_bounds = array<i64: 4, 36>}, {pipeline_mode = #tpu.pipeline_mode<synchronous>, transform_indices = @transform_6, window_bounds = array<i64: 4, 1>}, {pipeline_mode = #tpu.pipeline_mode<synchronous>, transform_indices = @transform_7, window_bounds = array<i64: 4, 36>}, {pipeline_mode = #tpu.pipeline_mode<synchronous>, transform_indices = @transform_8, window_bounds = array<i64: 4, 1>}, {pipeline_mode = #tpu.pipeline_mode<synchronous>, transform_indices = @transform_9, window_bounds = array<i64: 4, 36>}, {pipeline_mode = #tpu.pipeline_mode<synchronous>, transform_indices = @transform_10, window_bounds = array<i64: 4, 1>}, {pipeline_mode = #tpu.pipeline_mode<synchronous>, transform_indices = @transform_11, window_bounds = array<i64: 4, 36>}, {pipeline_mode = #tpu.pipeline_mode<synchronous>, transform_indices = @transform_12, window_bounds = array<i64: 4, 1>}, {pipeline_mode = #tpu.pipeline_mode<synchronous>, transform_indices = @transform_13, window_bounds = array<i64: 8, 8>}, {pipeline_mode = #tpu.pipeline_mode<synchronous>, transform_indices = @transform_14, window_bounds = array<i64: 8, 1>}, {pipeline_mode = #tpu.pipeline_mode<synchronous>, transform_indices = @transform_15, window_bounds = array<i64: 64, 4>}, {pipeline_mode = #tpu.pipeline_mode<synchronous>, transform_indices = @transform_16, window_bounds = array<i64: 4, 64>}, {transform_indices = @transform_17, window_bounds = array<i64: 1, 8, 64>}]} {
    %c0 = arith.constant 0 : index
    %c0_0 = arith.constant 0 : index
    %c0_1 = arith.constant 0 : index
    %0 = vector.load %arg1[%c0, %c0_0, %c0_1] : memref<1x8x64xf32, #tpu.memory_space<vmem>>, vector<1x8x64xf32>
    %1 = vector.shape_cast %0 : vector<1x8x64xf32> to vector<8x64xf32>
    %2 = arith.truncf %1 : vector<8x64xf32> to vector<8x64xbf16>
    %c0_2 = arith.constant 0 : index
    %c0_3 = arith.constant 0 : index
    %3 = vector.load %arg2[%c0_2, %c0_3] : memref<4x8xbf16, #tpu.memory_space<vmem>>, vector<4x8xbf16>
    %cst = arith.constant dense<0.000000e+00> : vector<4x64xf32>
    %4 = tpu.matmul %3, %2, %cst {dimension_numbers = #tpu.dot_dimension_numbers<[1], [0], [0], [1], [0, 0, 1, 1], [], []>} : vector<4x8xbf16>, vector<8x64xbf16>, vector<4x64xf32> -> vector<4x64xf32>
    %c0_4 = arith.constant 0 : index
    %c0_5 = arith.constant 0 : index
    %5 = vector.load %arg3[%c0_4, %c0_5] : memref<4x1xf32, #tpu.memory_space<vmem>>, vector<4x1xf32>
    %6 = vector.broadcast %5 : vector<4x1xf32> to vector<4x64xf32>
    %7 = arith.addf %4, %6 : vector<4x64xf32>
    %cst_6 = arith.constant 0.000000e+00 : f32
    %8 = vector.broadcast %cst_6 : f32 to vector<4x64xf32>
    %9 = arith.maximumf %7, %8 : vector<4x64xf32>
    %c0_7 = arith.constant 0 : index
    %c0_8 = arith.constant 0 : index
    %10 = vector.load %arg4[%c0_7, %c0_8] : memref<4x8xbf16, #tpu.memory_space<vmem>>, vector<4x8xbf16>
    %cst_9 = arith.constant dense<0.000000e+00> : vector<4x64xf32>
    %11 = tpu.matmul %10, %2, %cst_9 {dimension_numbers = #tpu.dot_dimension_numbers<[1], [0], [0], [1], [0, 0, 1, 1], [], []>} : vector<4x8xbf16>, vector<8x64xbf16>, vector<4x64xf32> -> vector<4x64xf32>
    %c0_10 = arith.constant 0 : index
    %c0_11 = arith.constant 0 : index
    %12 = vector.load %arg5[%c0_10, %c0_11] : memref<4x1xf32, #tpu.memory_space<vmem>>, vector<4x1xf32>
    %13 = vector.broadcast %12 : vector<4x1xf32> to vector<4x64xf32>
    %14 = arith.addf %11, %13 : vector<4x64xf32>
    %cst_12 = arith.constant 0.000000e+00 : f32
    %15 = vector.broadcast %cst_12 : f32 to vector<4x64xf32>
    %16 = arith.maximumf %14, %15 : vector<4x64xf32>
    %c0_13 = arith.constant 0 : index
    %c0_14 = arith.constant 0 : index
    %17 = vector.load %arg6[%c0_13, %c0_14] : memref<4x36xbf16, #tpu.memory_space<vmem>>, vector<4x36xbf16>
    %c0_15 = arith.constant 0 : index
    %c0_16 = arith.constant 0 : index
    %18 = vector.load %arg7[%c0_15, %c0_16] : memref<4x1xf32, #tpu.memory_space<vmem>>, vector<4x1xf32>
    %19 = tpu.iota {dimensions = array<i32: 1>} : vector<4x64xi32>
    %c7_i32 = arith.constant 7 : i32
    %20 = vector.broadcast %c7_i32 : i32 to vector<4x64xi32>
    %21 = arith.andi %19, %20 : vector<4x64xi32>
    %cst_17 = arith.constant 0.000000e+00 : f32
    %22 = vector.broadcast %cst_17 : f32 to vector<4x9xf32>
    %23 = vector.extract_strided_slice %9 {offsets = [0, 0], sizes = [4, 55], strides = [1, 1]} : vector<4x64xf32> to vector<4x55xf32>
    %24 = tpu.concatenate %22, %23 in 1 : vector<4x9xf32>, vector<4x55xf32> -> vector<4x64xf32>
    %c1_i32 = arith.constant 1 : i32
    %25 = vector.broadcast %c1_i32 : i32 to vector<4x64xi32>
    %26 = arith.cmpi sge, %21, %25 : vector<4x64xi32>
    %cst_18 = arith.constant 0.000000e+00 : f32
    %27 = vector.broadcast %cst_18 : f32 to vector<4x64xf32>
    %28 = arith.select %26, %24, %27 : vector<4x64xi1>, vector<4x64xf32>
    %cst_19 = arith.constant 0.000000e+00 : f32
    %29 = vector.broadcast %cst_19 : f32 to vector<4x8xf32>
    %30 = vector.extract_strided_slice %9 {offsets = [0, 0], sizes = [4, 56], strides = [1, 1]} : vector<4x64xf32> to vector<4x56xf32>
    %31 = tpu.concatenate %29, %30 in 1 : vector<4x8xf32>, vector<4x56xf32> -> vector<4x64xf32>
    %cst_20 = arith.constant 0.000000e+00 : f32
    %32 = vector.broadcast %cst_20 : f32 to vector<4x7xf32>
    %33 = vector.extract_strided_slice %9 {offsets = [0, 0], sizes = [4, 57], strides = [1, 1]} : vector<4x64xf32> to vector<4x57xf32>
    %34 = tpu.concatenate %32, %33 in 1 : vector<4x7xf32>, vector<4x57xf32> -> vector<4x64xf32>
    %c6_i32 = arith.constant 6 : i32
    %35 = vector.broadcast %c6_i32 : i32 to vector<4x64xi32>
    %36 = arith.cmpi sle, %21, %35 : vector<4x64xi32>
    %cst_21 = arith.constant 0.000000e+00 : f32
    %37 = vector.broadcast %cst_21 : f32 to vector<4x64xf32>
    %38 = arith.select %36, %34, %37 : vector<4x64xi1>, vector<4x64xf32>
    %cst_22 = arith.constant 0.000000e+00 : f32
    %39 = vector.broadcast %cst_22 : f32 to vector<4x1xf32>
    %40 = vector.extract_strided_slice %9 {offsets = [0, 0], sizes = [4, 63], strides = [1, 1]} : vector<4x64xf32> to vector<4x63xf32>
    %41 = tpu.concatenate %39, %40 in 1 : vector<4x1xf32>, vector<4x63xf32> -> vector<4x64xf32>
    %c1_i32_23 = arith.constant 1 : i32
    %42 = vector.broadcast %c1_i32_23 : i32 to vector<4x64xi32>
    %43 = arith.cmpi sge, %21, %42 : vector<4x64xi32>
    %cst_24 = arith.constant 0.000000e+00 : f32
    %44 = vector.broadcast %cst_24 : f32 to vector<4x64xf32>
    %45 = arith.select %43, %41, %44 : vector<4x64xi1>, vector<4x64xf32>
    %46 = vector.extract_strided_slice %9 {offsets = [0, 1], sizes = [4, 63], strides = [1, 1]} : vector<4x64xf32> to vector<4x63xf32>
    %cst_25 = arith.constant 0.000000e+00 : f32
    %47 = vector.broadcast %cst_25 : f32 to vector<4x1xf32>
    %48 = tpu.concatenate %46, %47 in 1 : vector<4x63xf32>, vector<4x1xf32> -> vector<4x64xf32>
    %c6_i32_26 = arith.constant 6 : i32
    %49 = vector.broadcast %c6_i32_26 : i32 to vector<4x64xi32>
    %50 = arith.cmpi sle, %21, %49 : vector<4x64xi32>
    %cst_27 = arith.constant 0.000000e+00 : f32
    %51 = vector.broadcast %cst_27 : f32 to vector<4x64xf32>
    %52 = arith.select %50, %48, %51 : vector<4x64xi1>, vector<4x64xf32>
    %53 = vector.extract_strided_slice %9 {offsets = [0, 7], sizes = [4, 57], strides = [1, 1]} : vector<4x64xf32> to vector<4x57xf32>
    %cst_28 = arith.constant 0.000000e+00 : f32
    %54 = vector.broadcast %cst_28 : f32 to vector<4x7xf32>
    %55 = tpu.concatenate %53, %54 in 1 : vector<4x57xf32>, vector<4x7xf32> -> vector<4x64xf32>
    %c1_i32_29 = arith.constant 1 : i32
    %56 = vector.broadcast %c1_i32_29 : i32 to vector<4x64xi32>
    %57 = arith.cmpi sge, %21, %56 : vector<4x64xi32>
    %cst_30 = arith.constant 0.000000e+00 : f32
    %58 = vector.broadcast %cst_30 : f32 to vector<4x64xf32>
    %59 = arith.select %57, %55, %58 : vector<4x64xi1>, vector<4x64xf32>
    %60 = vector.extract_strided_slice %9 {offsets = [0, 8], sizes = [4, 56], strides = [1, 1]} : vector<4x64xf32> to vector<4x56xf32>
    %cst_31 = arith.constant 0.000000e+00 : f32
    %61 = vector.broadcast %cst_31 : f32 to vector<4x8xf32>
    %62 = tpu.concatenate %60, %61 in 1 : vector<4x56xf32>, vector<4x8xf32> -> vector<4x64xf32>
    %63 = vector.extract_strided_slice %9 {offsets = [0, 9], sizes = [4, 55], strides = [1, 1]} : vector<4x64xf32> to vector<4x55xf32>
    %cst_32 = arith.constant 0.000000e+00 : f32
    %64 = vector.broadcast %cst_32 : f32 to vector<4x9xf32>
    %65 = tpu.concatenate %63, %64 in 1 : vector<4x55xf32>, vector<4x9xf32> -> vector<4x64xf32>
    %c6_i32_33 = arith.constant 6 : i32
    %66 = vector.broadcast %c6_i32_33 : i32 to vector<4x64xi32>
    %67 = arith.cmpi sle, %21, %66 : vector<4x64xi32>
    %cst_34 = arith.constant 0.000000e+00 : f32
    %68 = vector.broadcast %cst_34 : f32 to vector<4x64xf32>
    %69 = arith.select %67, %65, %68 : vector<4x64xi1>, vector<4x64xf32>
    %70 = tpu.concatenate %28, %31, %38, %45, %9, %52, %59, %62, %69 in 0 : vector<4x64xf32>, vector<4x64xf32>, vector<4x64xf32>, vector<4x64xf32>, vector<4x64xf32>, vector<4x64xf32>, vector<4x64xf32>, vector<4x64xf32>, vector<4x64xf32> -> vector<36x64xf32>
    %71 = arith.truncf %70 : vector<36x64xf32> to vector<36x64xbf16>
    %cst_35 = arith.constant dense<0.000000e+00> : vector<4x64xf32>
    %72 = tpu.matmul %17, %71, %cst_35 {dimension_numbers = #tpu.dot_dimension_numbers<[1], [0], [0], [1], [0, 0, 1, 1], [], []>} : vector<4x36xbf16>, vector<36x64xbf16>, vector<4x64xf32> -> vector<4x64xf32>
    %73 = vector.broadcast %18 : vector<4x1xf32> to vector<4x64xf32>
    %74 = arith.addf %72, %73 : vector<4x64xf32>
    %cst_36 = arith.constant 0.000000e+00 : f32
    %75 = vector.broadcast %cst_36 : f32 to vector<4x64xf32>
    %76 = arith.maximumf %74, %75 : vector<4x64xf32>
    %77 = arith.truncf %16 : vector<4x64xf32> to vector<4x64xbf16>
    %c0_37 = arith.constant 0 : index
    %c0_38 = arith.constant 0 : index
    %78 = vector.load %arg16[%c0_37, %c0_38] : memref<64x4xbf16, #tpu.memory_space<vmem>>, vector<64x4xbf16>
    %cst_39 = arith.constant dense<0.000000e+00> : vector<4x4xf32>
    %79 = tpu.matmul %77, %78, %cst_39 {dimension_numbers = #tpu.dot_dimension_numbers<[1], [0], [0], [1], [0, 0, 1, 1], [], []>} : vector<4x64xbf16>, vector<64x4xbf16>, vector<4x4xf32> -> vector<4x4xf32>
    %c0_40 = arith.constant 0 : index
    %c0_41 = arith.constant 0 : index
    %80 = vector.load %arg8[%c0_40, %c0_41] : memref<4x36xbf16, #tpu.memory_space<vmem>>, vector<4x36xbf16>
    %c0_42 = arith.constant 0 : index
    %c0_43 = arith.constant 0 : index
    %81 = vector.load %arg9[%c0_42, %c0_43] : memref<4x1xf32, #tpu.memory_space<vmem>>, vector<4x1xf32>
    %82 = tpu.iota {dimensions = array<i32: 1>} : vector<4x4xi32>
    %c1_i32_44 = arith.constant 1 : i32
    %83 = vector.broadcast %c1_i32_44 : i32 to vector<4x4xi32>
    %84 = arith.andi %82, %83 : vector<4x4xi32>
    %cst_45 = arith.constant 0.000000e+00 : f32
    %85 = vector.broadcast %cst_45 : f32 to vector<4x3xf32>
    %86 = vector.extract_strided_slice %79 {offsets = [0, 0], sizes = [4, 1], strides = [1, 1]} : vector<4x4xf32> to vector<4x1xf32>
    %87 = tpu.concatenate %85, %86 in 1 : vector<4x3xf32>, vector<4x1xf32> -> vector<4x4xf32>
    %c1_i32_46 = arith.constant 1 : i32
    %88 = vector.broadcast %c1_i32_46 : i32 to vector<4x4xi32>
    %89 = arith.cmpi sge, %84, %88 : vector<4x4xi32>
    %cst_47 = arith.constant 0.000000e+00 : f32
    %90 = vector.broadcast %cst_47 : f32 to vector<4x4xf32>
    %91 = arith.select %89, %87, %90 : vector<4x4xi1>, vector<4x4xf32>
    %cst_48 = arith.constant 0.000000e+00 : f32
    %92 = vector.broadcast %cst_48 : f32 to vector<4x2xf32>
    %93 = vector.extract_strided_slice %79 {offsets = [0, 0], sizes = [4, 2], strides = [1, 1]} : vector<4x4xf32> to vector<4x2xf32>
    %94 = tpu.concatenate %92, %93 in 1 : vector<4x2xf32>, vector<4x2xf32> -> vector<4x4xf32>
    %cst_49 = arith.constant 0.000000e+00 : f32
    %95 = vector.broadcast %cst_49 : f32 to vector<4x1xf32>
    %96 = vector.extract_strided_slice %79 {offsets = [0, 0], sizes = [4, 3], strides = [1, 1]} : vector<4x4xf32> to vector<4x3xf32>
    %97 = tpu.concatenate %95, %96 in 1 : vector<4x1xf32>, vector<4x3xf32> -> vector<4x4xf32>
    %c0_i32 = arith.constant 0 : i32
    %98 = vector.broadcast %c0_i32 : i32 to vector<4x4xi32>
    %99 = arith.cmpi sle, %84, %98 : vector<4x4xi32>
    %cst_50 = arith.constant 0.000000e+00 : f32
    %100 = vector.broadcast %cst_50 : f32 to vector<4x4xf32>
    %101 = arith.select %99, %97, %100 : vector<4x4xi1>, vector<4x4xf32>
    %cst_51 = arith.constant 0.000000e+00 : f32
    %102 = vector.broadcast %cst_51 : f32 to vector<4x1xf32>
    %103 = vector.extract_strided_slice %79 {offsets = [0, 0], sizes = [4, 3], strides = [1, 1]} : vector<4x4xf32> to vector<4x3xf32>
    %104 = tpu.concatenate %102, %103 in 1 : vector<4x1xf32>, vector<4x3xf32> -> vector<4x4xf32>
    %c1_i32_52 = arith.constant 1 : i32
    %105 = vector.broadcast %c1_i32_52 : i32 to vector<4x4xi32>
    %106 = arith.cmpi sge, %84, %105 : vector<4x4xi32>
    %cst_53 = arith.constant 0.000000e+00 : f32
    %107 = vector.broadcast %cst_53 : f32 to vector<4x4xf32>
    %108 = arith.select %106, %104, %107 : vector<4x4xi1>, vector<4x4xf32>
    %109 = vector.extract_strided_slice %79 {offsets = [0, 1], sizes = [4, 3], strides = [1, 1]} : vector<4x4xf32> to vector<4x3xf32>
    %cst_54 = arith.constant 0.000000e+00 : f32
    %110 = vector.broadcast %cst_54 : f32 to vector<4x1xf32>
    %111 = tpu.concatenate %109, %110 in 1 : vector<4x3xf32>, vector<4x1xf32> -> vector<4x4xf32>
    %c0_i32_55 = arith.constant 0 : i32
    %112 = vector.broadcast %c0_i32_55 : i32 to vector<4x4xi32>
    %113 = arith.cmpi sle, %84, %112 : vector<4x4xi32>
    %cst_56 = arith.constant 0.000000e+00 : f32
    %114 = vector.broadcast %cst_56 : f32 to vector<4x4xf32>
    %115 = arith.select %113, %111, %114 : vector<4x4xi1>, vector<4x4xf32>
    %116 = vector.extract_strided_slice %79 {offsets = [0, 1], sizes = [4, 3], strides = [1, 1]} : vector<4x4xf32> to vector<4x3xf32>
    %cst_57 = arith.constant 0.000000e+00 : f32
    %117 = vector.broadcast %cst_57 : f32 to vector<4x1xf32>
    %118 = tpu.concatenate %116, %117 in 1 : vector<4x3xf32>, vector<4x1xf32> -> vector<4x4xf32>
    %c1_i32_58 = arith.constant 1 : i32
    %119 = vector.broadcast %c1_i32_58 : i32 to vector<4x4xi32>
    %120 = arith.cmpi sge, %84, %119 : vector<4x4xi32>
    %cst_59 = arith.constant 0.000000e+00 : f32
    %121 = vector.broadcast %cst_59 : f32 to vector<4x4xf32>
    %122 = arith.select %120, %118, %121 : vector<4x4xi1>, vector<4x4xf32>
    %123 = vector.extract_strided_slice %79 {offsets = [0, 2], sizes = [4, 2], strides = [1, 1]} : vector<4x4xf32> to vector<4x2xf32>
    %cst_60 = arith.constant 0.000000e+00 : f32
    %124 = vector.broadcast %cst_60 : f32 to vector<4x2xf32>
    %125 = tpu.concatenate %123, %124 in 1 : vector<4x2xf32>, vector<4x2xf32> -> vector<4x4xf32>
    %126 = vector.extract_strided_slice %79 {offsets = [0, 3], sizes = [4, 1], strides = [1, 1]} : vector<4x4xf32> to vector<4x1xf32>
    %cst_61 = arith.constant 0.000000e+00 : f32
    %127 = vector.broadcast %cst_61 : f32 to vector<4x3xf32>
    %128 = tpu.concatenate %126, %127 in 1 : vector<4x1xf32>, vector<4x3xf32> -> vector<4x4xf32>
    %c0_i32_62 = arith.constant 0 : i32
    %129 = vector.broadcast %c0_i32_62 : i32 to vector<4x4xi32>
    %130 = arith.cmpi sle, %84, %129 : vector<4x4xi32>
    %cst_63 = arith.constant 0.000000e+00 : f32
    %131 = vector.broadcast %cst_63 : f32 to vector<4x4xf32>
    %132 = arith.select %130, %128, %131 : vector<4x4xi1>, vector<4x4xf32>
    %133 = tpu.concatenate %91, %94, %101, %108, %79, %115, %122, %125, %132 in 0 : vector<4x4xf32>, vector<4x4xf32>, vector<4x4xf32>, vector<4x4xf32>, vector<4x4xf32>, vector<4x4xf32>, vector<4x4xf32>, vector<4x4xf32>, vector<4x4xf32> -> vector<36x4xf32>
    %134 = arith.truncf %133 : vector<36x4xf32> to vector<36x4xbf16>
    %cst_64 = arith.constant dense<0.000000e+00> : vector<4x4xf32>
    %135 = tpu.matmul %80, %134, %cst_64 {dimension_numbers = #tpu.dot_dimension_numbers<[1], [0], [0], [1], [0, 0, 1, 1], [], []>} : vector<4x36xbf16>, vector<36x4xbf16>, vector<4x4xf32> -> vector<4x4xf32>
    %136 = vector.broadcast %81 : vector<4x1xf32> to vector<4x4xf32>
    %137 = arith.addf %135, %136 : vector<4x4xf32>
    %138 = arith.truncf %137 : vector<4x4xf32> to vector<4x4xbf16>
    %c0_65 = arith.constant 0 : index
    %c0_66 = arith.constant 0 : index
    %139 = vector.load %arg17[%c0_65, %c0_66] : memref<4x64xbf16, #tpu.memory_space<vmem>>, vector<4x64xbf16>
    %cst_67 = arith.constant dense<0.000000e+00> : vector<4x64xf32>
    %140 = tpu.matmul %138, %139, %cst_67 {dimension_numbers = #tpu.dot_dimension_numbers<[1], [0], [0], [1], [0, 0, 1, 1], [], []>} : vector<4x4xbf16>, vector<4x64xbf16>, vector<4x64xf32> -> vector<4x64xf32>
    %c0_68 = arith.constant 0 : index
    %c0_69 = arith.constant 0 : index
    %141 = vector.load %arg10[%c0_68, %c0_69] : memref<4x36xbf16, #tpu.memory_space<vmem>>, vector<4x36xbf16>
    %c0_70 = arith.constant 0 : index
    %c0_71 = arith.constant 0 : index
    %142 = vector.load %arg11[%c0_70, %c0_71] : memref<4x1xf32, #tpu.memory_space<vmem>>, vector<4x1xf32>
    %143 = tpu.iota {dimensions = array<i32: 1>} : vector<4x64xi32>
    %c7_i32_72 = arith.constant 7 : i32
    %144 = vector.broadcast %c7_i32_72 : i32 to vector<4x64xi32>
    %145 = arith.andi %143, %144 : vector<4x64xi32>
    %cst_73 = arith.constant 0.000000e+00 : f32
    %146 = vector.broadcast %cst_73 : f32 to vector<4x9xf32>
    %147 = vector.extract_strided_slice %16 {offsets = [0, 0], sizes = [4, 55], strides = [1, 1]} : vector<4x64xf32> to vector<4x55xf32>
    %148 = tpu.concatenate %146, %147 in 1 : vector<4x9xf32>, vector<4x55xf32> -> vector<4x64xf32>
    %c1_i32_74 = arith.constant 1 : i32
    %149 = vector.broadcast %c1_i32_74 : i32 to vector<4x64xi32>
    %150 = arith.cmpi sge, %145, %149 : vector<4x64xi32>
    %cst_75 = arith.constant 0.000000e+00 : f32
    %151 = vector.broadcast %cst_75 : f32 to vector<4x64xf32>
    %152 = arith.select %150, %148, %151 : vector<4x64xi1>, vector<4x64xf32>
    %cst_76 = arith.constant 0.000000e+00 : f32
    %153 = vector.broadcast %cst_76 : f32 to vector<4x8xf32>
    %154 = vector.extract_strided_slice %16 {offsets = [0, 0], sizes = [4, 56], strides = [1, 1]} : vector<4x64xf32> to vector<4x56xf32>
    %155 = tpu.concatenate %153, %154 in 1 : vector<4x8xf32>, vector<4x56xf32> -> vector<4x64xf32>
    %cst_77 = arith.constant 0.000000e+00 : f32
    %156 = vector.broadcast %cst_77 : f32 to vector<4x7xf32>
    %157 = vector.extract_strided_slice %16 {offsets = [0, 0], sizes = [4, 57], strides = [1, 1]} : vector<4x64xf32> to vector<4x57xf32>
    %158 = tpu.concatenate %156, %157 in 1 : vector<4x7xf32>, vector<4x57xf32> -> vector<4x64xf32>
    %c6_i32_78 = arith.constant 6 : i32
    %159 = vector.broadcast %c6_i32_78 : i32 to vector<4x64xi32>
    %160 = arith.cmpi sle, %145, %159 : vector<4x64xi32>
    %cst_79 = arith.constant 0.000000e+00 : f32
    %161 = vector.broadcast %cst_79 : f32 to vector<4x64xf32>
    %162 = arith.select %160, %158, %161 : vector<4x64xi1>, vector<4x64xf32>
    %cst_80 = arith.constant 0.000000e+00 : f32
    %163 = vector.broadcast %cst_80 : f32 to vector<4x1xf32>
    %164 = vector.extract_strided_slice %16 {offsets = [0, 0], sizes = [4, 63], strides = [1, 1]} : vector<4x64xf32> to vector<4x63xf32>
    %165 = tpu.concatenate %163, %164 in 1 : vector<4x1xf32>, vector<4x63xf32> -> vector<4x64xf32>
    %c1_i32_81 = arith.constant 1 : i32
    %166 = vector.broadcast %c1_i32_81 : i32 to vector<4x64xi32>
    %167 = arith.cmpi sge, %145, %166 : vector<4x64xi32>
    %cst_82 = arith.constant 0.000000e+00 : f32
    %168 = vector.broadcast %cst_82 : f32 to vector<4x64xf32>
    %169 = arith.select %167, %165, %168 : vector<4x64xi1>, vector<4x64xf32>
    %170 = vector.extract_strided_slice %16 {offsets = [0, 1], sizes = [4, 63], strides = [1, 1]} : vector<4x64xf32> to vector<4x63xf32>
    %cst_83 = arith.constant 0.000000e+00 : f32
    %171 = vector.broadcast %cst_83 : f32 to vector<4x1xf32>
    %172 = tpu.concatenate %170, %171 in 1 : vector<4x63xf32>, vector<4x1xf32> -> vector<4x64xf32>
    %c6_i32_84 = arith.constant 6 : i32
    %173 = vector.broadcast %c6_i32_84 : i32 to vector<4x64xi32>
    %174 = arith.cmpi sle, %145, %173 : vector<4x64xi32>
    %cst_85 = arith.constant 0.000000e+00 : f32
    %175 = vector.broadcast %cst_85 : f32 to vector<4x64xf32>
    %176 = arith.select %174, %172, %175 : vector<4x64xi1>, vector<4x64xf32>
    %177 = vector.extract_strided_slice %16 {offsets = [0, 7], sizes = [4, 57], strides = [1, 1]} : vector<4x64xf32> to vector<4x57xf32>
    %cst_86 = arith.constant 0.000000e+00 : f32
    %178 = vector.broadcast %cst_86 : f32 to vector<4x7xf32>
    %179 = tpu.concatenate %177, %178 in 1 : vector<4x57xf32>, vector<4x7xf32> -> vector<4x64xf32>
    %c1_i32_87 = arith.constant 1 : i32
    %180 = vector.broadcast %c1_i32_87 : i32 to vector<4x64xi32>
    %181 = arith.cmpi sge, %145, %180 : vector<4x64xi32>
    %cst_88 = arith.constant 0.000000e+00 : f32
    %182 = vector.broadcast %cst_88 : f32 to vector<4x64xf32>
    %183 = arith.select %181, %179, %182 : vector<4x64xi1>, vector<4x64xf32>
    %184 = vector.extract_strided_slice %16 {offsets = [0, 8], sizes = [4, 56], strides = [1, 1]} : vector<4x64xf32> to vector<4x56xf32>
    %cst_89 = arith.constant 0.000000e+00 : f32
    %185 = vector.broadcast %cst_89 : f32 to vector<4x8xf32>
    %186 = tpu.concatenate %184, %185 in 1 : vector<4x56xf32>, vector<4x8xf32> -> vector<4x64xf32>
    %187 = vector.extract_strided_slice %16 {offsets = [0, 9], sizes = [4, 55], strides = [1, 1]} : vector<4x64xf32> to vector<4x55xf32>
    %cst_90 = arith.constant 0.000000e+00 : f32
    %188 = vector.broadcast %cst_90 : f32 to vector<4x9xf32>
    %189 = tpu.concatenate %187, %188 in 1 : vector<4x55xf32>, vector<4x9xf32> -> vector<4x64xf32>
    %c6_i32_91 = arith.constant 6 : i32
    %190 = vector.broadcast %c6_i32_91 : i32 to vector<4x64xi32>
    %191 = arith.cmpi sle, %145, %190 : vector<4x64xi32>
    %cst_92 = arith.constant 0.000000e+00 : f32
    %192 = vector.broadcast %cst_92 : f32 to vector<4x64xf32>
    %193 = arith.select %191, %189, %192 : vector<4x64xi1>, vector<4x64xf32>
    %194 = tpu.concatenate %152, %155, %162, %169, %16, %176, %183, %186, %193 in 0 : vector<4x64xf32>, vector<4x64xf32>, vector<4x64xf32>, vector<4x64xf32>, vector<4x64xf32>, vector<4x64xf32>, vector<4x64xf32>, vector<4x64xf32>, vector<4x64xf32> -> vector<36x64xf32>
    %195 = arith.truncf %194 : vector<36x64xf32> to vector<36x64xbf16>
    %cst_93 = arith.constant dense<0.000000e+00> : vector<4x64xf32>
    %196 = tpu.matmul %141, %195, %cst_93 {dimension_numbers = #tpu.dot_dimension_numbers<[1], [0], [0], [1], [0, 0, 1, 1], [], []>} : vector<4x36xbf16>, vector<36x64xbf16>, vector<4x64xf32> -> vector<4x64xf32>
    %197 = vector.broadcast %142 : vector<4x1xf32> to vector<4x64xf32>
    %198 = arith.addf %196, %197 : vector<4x64xf32>
    %199 = arith.addf %16, %140 : vector<4x64xf32>
    %cst_94 = arith.constant 9.99999993E-9 : f32
    %200 = vector.broadcast %cst_94 : f32 to vector<4x64xf32>
    %201 = arith.addf %199, %200 : vector<4x64xf32>
    %cst_95 = arith.constant 0.000000e+00 : f32
    %202 = vector.broadcast %cst_95 : f32 to vector<4x64xf32>
    %203 = arith.subf %202, %201 : vector<4x64xf32>
    %204 = math.exp %203 : vector<4x64xf32>
    %cst_96 = arith.constant 1.000000e+00 : f32
    %205 = vector.broadcast %cst_96 : f32 to vector<4x64xf32>
    %206 = arith.addf %205, %204 : vector<4x64xf32>
    %cst_97 = arith.constant 1.000000e+00 : f32
    %207 = vector.broadcast %cst_97 : f32 to vector<4x64xf32>
    %208 = arith.divf %207, %206 : vector<4x64xf32>
    %209 = arith.mulf %198, %208 : vector<4x64xf32>
    %c0_98 = arith.constant 0 : index
    %c0_99 = arith.constant 0 : index
    %210 = vector.load %arg12[%c0_98, %c0_99] : memref<4x36xbf16, #tpu.memory_space<vmem>>, vector<4x36xbf16>
    %c0_100 = arith.constant 0 : index
    %c0_101 = arith.constant 0 : index
    %211 = vector.load %arg13[%c0_100, %c0_101] : memref<4x1xf32, #tpu.memory_space<vmem>>, vector<4x1xf32>
    %212 = tpu.iota {dimensions = array<i32: 1>} : vector<4x64xi32>
    %c7_i32_102 = arith.constant 7 : i32
    %213 = vector.broadcast %c7_i32_102 : i32 to vector<4x64xi32>
    %214 = arith.andi %212, %213 : vector<4x64xi32>
    %cst_103 = arith.constant 0.000000e+00 : f32
    %215 = vector.broadcast %cst_103 : f32 to vector<4x9xf32>
    %216 = vector.extract_strided_slice %209 {offsets = [0, 0], sizes = [4, 55], strides = [1, 1]} : vector<4x64xf32> to vector<4x55xf32>
    %217 = tpu.concatenate %215, %216 in 1 : vector<4x9xf32>, vector<4x55xf32> -> vector<4x64xf32>
    %c1_i32_104 = arith.constant 1 : i32
    %218 = vector.broadcast %c1_i32_104 : i32 to vector<4x64xi32>
    %219 = arith.cmpi sge, %214, %218 : vector<4x64xi32>
    %cst_105 = arith.constant 0.000000e+00 : f32
    %220 = vector.broadcast %cst_105 : f32 to vector<4x64xf32>
    %221 = arith.select %219, %217, %220 : vector<4x64xi1>, vector<4x64xf32>
    %cst_106 = arith.constant 0.000000e+00 : f32
    %222 = vector.broadcast %cst_106 : f32 to vector<4x8xf32>
    %223 = vector.extract_strided_slice %209 {offsets = [0, 0], sizes = [4, 56], strides = [1, 1]} : vector<4x64xf32> to vector<4x56xf32>
    %224 = tpu.concatenate %222, %223 in 1 : vector<4x8xf32>, vector<4x56xf32> -> vector<4x64xf32>
    %cst_107 = arith.constant 0.000000e+00 : f32
    %225 = vector.broadcast %cst_107 : f32 to vector<4x7xf32>
    %226 = vector.extract_strided_slice %209 {offsets = [0, 0], sizes = [4, 57], strides = [1, 1]} : vector<4x64xf32> to vector<4x57xf32>
    %227 = tpu.concatenate %225, %226 in 1 : vector<4x7xf32>, vector<4x57xf32> -> vector<4x64xf32>
    %c6_i32_108 = arith.constant 6 : i32
    %228 = vector.broadcast %c6_i32_108 : i32 to vector<4x64xi32>
    %229 = arith.cmpi sle, %214, %228 : vector<4x64xi32>
    %cst_109 = arith.constant 0.000000e+00 : f32
    %230 = vector.broadcast %cst_109 : f32 to vector<4x64xf32>
    %231 = arith.select %229, %227, %230 : vector<4x64xi1>, vector<4x64xf32>
    %cst_110 = arith.constant 0.000000e+00 : f32
    %232 = vector.broadcast %cst_110 : f32 to vector<4x1xf32>
    %233 = vector.extract_strided_slice %209 {offsets = [0, 0], sizes = [4, 63], strides = [1, 1]} : vector<4x64xf32> to vector<4x63xf32>
    %234 = tpu.concatenate %232, %233 in 1 : vector<4x1xf32>, vector<4x63xf32> -> vector<4x64xf32>
    %c1_i32_111 = arith.constant 1 : i32
    %235 = vector.broadcast %c1_i32_111 : i32 to vector<4x64xi32>
    %236 = arith.cmpi sge, %214, %235 : vector<4x64xi32>
    %cst_112 = arith.constant 0.000000e+00 : f32
    %237 = vector.broadcast %cst_112 : f32 to vector<4x64xf32>
    %238 = arith.select %236, %234, %237 : vector<4x64xi1>, vector<4x64xf32>
    %239 = vector.extract_strided_slice %209 {offsets = [0, 1], sizes = [4, 63], strides = [1, 1]} : vector<4x64xf32> to vector<4x63xf32>
    %cst_113 = arith.constant 0.000000e+00 : f32
    %240 = vector.broadcast %cst_113 : f32 to vector<4x1xf32>
    %241 = tpu.concatenate %239, %240 in 1 : vector<4x63xf32>, vector<4x1xf32> -> vector<4x64xf32>
    %c6_i32_114 = arith.constant 6 : i32
    %242 = vector.broadcast %c6_i32_114 : i32 to vector<4x64xi32>
    %243 = arith.cmpi sle, %214, %242 : vector<4x64xi32>
    %cst_115 = arith.constant 0.000000e+00 : f32
    %244 = vector.broadcast %cst_115 : f32 to vector<4x64xf32>
    %245 = arith.select %243, %241, %244 : vector<4x64xi1>, vector<4x64xf32>
    %246 = vector.extract_strided_slice %209 {offsets = [0, 7], sizes = [4, 57], strides = [1, 1]} : vector<4x64xf32> to vector<4x57xf32>
    %cst_116 = arith.constant 0.000000e+00 : f32
    %247 = vector.broadcast %cst_116 : f32 to vector<4x7xf32>
    %248 = tpu.concatenate %246, %247 in 1 : vector<4x57xf32>, vector<4x7xf32> -> vector<4x64xf32>
    %c1_i32_117 = arith.constant 1 : i32
    %249 = vector.broadcast %c1_i32_117 : i32 to vector<4x64xi32>
    %250 = arith.cmpi sge, %214, %249 : vector<4x64xi32>
    %cst_118 = arith.constant 0.000000e+00 : f32
    %251 = vector.broadcast %cst_118 : f32 to vector<4x64xf32>
    %252 = arith.select %250, %248, %251 : vector<4x64xi1>, vector<4x64xf32>
    %253 = vector.extract_strided_slice %209 {offsets = [0, 8], sizes = [4, 56], strides = [1, 1]} : vector<4x64xf32> to vector<4x56xf32>
    %cst_119 = arith.constant 0.000000e+00 : f32
    %254 = vector.broadcast %cst_119 : f32 to vector<4x8xf32>
    %255 = tpu.concatenate %253, %254 in 1 : vector<4x56xf32>, vector<4x8xf32> -> vector<4x64xf32>
    %256 = vector.extract_strided_slice %209 {offsets = [0, 9], sizes = [4, 55], strides = [1, 1]} : vector<4x64xf32> to vector<4x55xf32>
    %cst_120 = arith.constant 0.000000e+00 : f32
    %257 = vector.broadcast %cst_120 : f32 to vector<4x9xf32>
    %258 = tpu.concatenate %256, %257 in 1 : vector<4x55xf32>, vector<4x9xf32> -> vector<4x64xf32>
    %c6_i32_121 = arith.constant 6 : i32
    %259 = vector.broadcast %c6_i32_121 : i32 to vector<4x64xi32>
    %260 = arith.cmpi sle, %214, %259 : vector<4x64xi32>
    %cst_122 = arith.constant 0.000000e+00 : f32
    %261 = vector.broadcast %cst_122 : f32 to vector<4x64xf32>
    %262 = arith.select %260, %258, %261 : vector<4x64xi1>, vector<4x64xf32>
    %263 = tpu.concatenate %221, %224, %231, %238, %209, %245, %252, %255, %262 in 0 : vector<4x64xf32>, vector<4x64xf32>, vector<4x64xf32>, vector<4x64xf32>, vector<4x64xf32>, vector<4x64xf32>, vector<4x64xf32>, vector<4x64xf32>, vector<4x64xf32> -> vector<36x64xf32>
    %264 = arith.truncf %263 : vector<36x64xf32> to vector<36x64xbf16>
    %cst_123 = arith.constant dense<0.000000e+00> : vector<4x64xf32>
    %265 = tpu.matmul %210, %264, %cst_123 {dimension_numbers = #tpu.dot_dimension_numbers<[1], [0], [0], [1], [0, 0, 1, 1], [], []>} : vector<4x36xbf16>, vector<36x64xbf16>, vector<4x64xf32> -> vector<4x64xf32>
    %266 = vector.broadcast %211 : vector<4x1xf32> to vector<4x64xf32>
    %267 = arith.addf %265, %266 : vector<4x64xf32>
    %cst_124 = arith.constant 0.000000e+00 : f32
    %268 = vector.broadcast %cst_124 : f32 to vector<4x64xf32>
    %269 = arith.maximumf %267, %268 : vector<4x64xf32>
    %270 = tpu.concatenate %76, %269 in 0 : vector<4x64xf32>, vector<4x64xf32> -> vector<8x64xf32>
    %271 = arith.truncf %270 : vector<8x64xf32> to vector<8x64xbf16>
    %c0_125 = arith.constant 0 : index
    %c0_126 = arith.constant 0 : index
    %272 = vector.load %arg14[%c0_125, %c0_126] : memref<8x8xbf16, #tpu.memory_space<vmem>>, vector<8x8xbf16>
    %cst_127 = arith.constant dense<0.000000e+00> : vector<8x64xf32>
    %273 = tpu.matmul %272, %271, %cst_127 {dimension_numbers = #tpu.dot_dimension_numbers<[1], [0], [0], [1], [0, 0, 1, 1], [], []>} : vector<8x8xbf16>, vector<8x64xbf16>, vector<8x64xf32> -> vector<8x64xf32>
    %c0_128 = arith.constant 0 : index
    %c0_129 = arith.constant 0 : index
    %274 = vector.load %arg15[%c0_128, %c0_129] : memref<8x1xf32, #tpu.memory_space<vmem>>, vector<8x1xf32>
    %275 = vector.broadcast %274 : vector<8x1xf32> to vector<8x64xf32>
    %276 = arith.addf %273, %275 : vector<8x64xf32>
    %277 = arith.addf %276, %1 : vector<8x64xf32>
    %cst_130 = arith.constant 0.000000e+00 : f32
    %278 = vector.broadcast %cst_130 : f32 to vector<8x64xf32>
    %279 = arith.maximumf %277, %278 : vector<8x64xf32>
    %c0_131 = arith.constant 0 : index
    %c0_132 = arith.constant 0 : index
    %c0_133 = arith.constant 0 : index
    %280 = vector.load %arg18[%c0_131, %c0_132, %c0_133] : memref<1x8x64xf32, #tpu.memory_space<vmem>>, vector<1x8x64xf32>
    %281 = vector.shape_cast %280 : vector<1x8x64xf32> to vector<8x64xf32>
    %282 = vector.shape_cast %279 : vector<8x64xf32> to vector<1x8x64xf32>
    tpu.vector_store %arg18[%c0_131, %c0_132, %c0_133], %282 {strides = array<i32>} : memref<1x8x64xf32, #tpu.memory_space<vmem>>, vector<1x8x64xf32>,
    return
  }
  func.func @transform_0(%arg0: i32) -> (i32, i32, i32) {
    %c0_i32 = arith.constant 0 : i32
    %c0_i32_0 = arith.constant 0 : i32
    %c0_i32_1 = arith.constant 0 : i32
    return %arg0, %c0_i32, %c0_i32_0 : i32, i32, i32
  }
  func.func @transform_1(%arg0: i32) -> (i32, i32) {
    %c0_i32 = arith.constant 0 : i32
    %c0_i32_0 = arith.constant 0 : i32
    %c0_i32_1 = arith.constant 0 : i32
    return %c0_i32, %c0_i32_0 : i32, i32
  }
  func.func @transform_2(%arg0: i32) -> (i32, i32) {
    %c0_i32 = arith.constant 0 : i32
    %c0_i32_0 = arith.constant 0 : i32
    %c0_i32_1 = arith.constant 0 : i32
    return %c0_i32, %c0_i32_0 : i32, i32
  }
  func.func @transform_3(%arg0: i32) -> (i32, i32) {
    %c0_i32 = arith.constant 0 : i32
    %c0_i32_0 = arith.constant 0 : i32
    %c0_i32_1 = arith.constant 0 : i32
    return %c0_i32, %c0_i32_0 : i32, i32
  }
  func.func @transform_4(%arg0: i32) -> (i32, i32) {
    %c0_i32 = arith.constant 0 : i32
    %c0_i32_0 = arith.constant 0 : i32
    %c0_i32_1 = arith.constant 0 : i32
    return %c0_i32, %c0_i32_0 : i32, i32
  }
  func.func @transform_5(%arg0: i32) -> (i32, i32) {
    %c0_i32 = arith.constant 0 : i32
    %c0_i32_0 = arith.constant 0 : i32
    %c0_i32_1 = arith.constant 0 : i32
    return %c0_i32, %c0_i32_0 : i32, i32
  }
  func.func @transform_6(%arg0: i32) -> (i32, i32) {
    %c0_i32 = arith.constant 0 : i32
    %c0_i32_0 = arith.constant 0 : i32
    %c0_i32_1 = arith.constant 0 : i32
    return %c0_i32, %c0_i32_0 : i32, i32
  }
  func.func @transform_7(%arg0: i32) -> (i32, i32) {
    %c0_i32 = arith.constant 0 : i32
    %c0_i32_0 = arith.constant 0 : i32
    %c0_i32_1 = arith.constant 0 : i32
    return %c0_i32, %c0_i32_0 : i32, i32
  }
  func.func @transform_8(%arg0: i32) -> (i32, i32) {
    %c0_i32 = arith.constant 0 : i32
    %c0_i32_0 = arith.constant 0 : i32
    %c0_i32_1 = arith.constant 0 : i32
    return %c0_i32, %c0_i32_0 : i32, i32
  }
  func.func @transform_9(%arg0: i32) -> (i32, i32) {
    %c0_i32 = arith.constant 0 : i32
    %c0_i32_0 = arith.constant 0 : i32
    %c0_i32_1 = arith.constant 0 : i32
    return %c0_i32, %c0_i32_0 : i32, i32
  }
  func.func @transform_10(%arg0: i32) -> (i32, i32) {
    %c0_i32 = arith.constant 0 : i32
    %c0_i32_0 = arith.constant 0 : i32
    %c0_i32_1 = arith.constant 0 : i32
    return %c0_i32, %c0_i32_0 : i32, i32
  }
  func.func @transform_11(%arg0: i32) -> (i32, i32) {
    %c0_i32 = arith.constant 0 : i32
    %c0_i32_0 = arith.constant 0 : i32
    %c0_i32_1 = arith.constant 0 : i32
    return %c0_i32, %c0_i32_0 : i32, i32
  }
  func.func @transform_12(%arg0: i32) -> (i32, i32) {
    %c0_i32 = arith.constant 0 : i32
    %c0_i32_0 = arith.constant 0 : i32
    %c0_i32_1 = arith.constant 0 : i32
    return %c0_i32, %c0_i32_0 : i32, i32
  }
  func.func @transform_13(%arg0: i32) -> (i32, i32) {
    %c0_i32 = arith.constant 0 : i32
    %c0_i32_0 = arith.constant 0 : i32
    %c0_i32_1 = arith.constant 0 : i32
    return %c0_i32, %c0_i32_0 : i32, i32
  }
  func.func @transform_14(%arg0: i32) -> (i32, i32) {
    %c0_i32 = arith.constant 0 : i32
    %c0_i32_0 = arith.constant 0 : i32
    %c0_i32_1 = arith.constant 0 : i32
    return %c0_i32, %c0_i32_0 : i32, i32
  }
  func.func @transform_15(%arg0: i32) -> (i32, i32) {
    %c0_i32 = arith.constant 0 : i32
    %c0_i32_0 = arith.constant 0 : i32
    %c0_i32_1 = arith.constant 0 : i32
    return %c0_i32, %c0_i32_0 : i32, i32
  }
  func.func @transform_16(%arg0: i32) -> (i32, i32) {
    %c0_i32 = arith.constant 0 : i32
    %c0_i32_0 = arith.constant 0 : i32
    %c0_i32_1 = arith.constant 0 : i32
    return %c0_i32, %c0_i32_0 : i32, i32
  }
  func.func @transform_17(%arg0: i32) -> (i32, i32, i32) {
    %c0_i32 = arith.constant 0 : i32
    %c0_i32_0 = arith.constant 0 : i32
    %c0_i32_1 = arith.constant 0 : i32
    return %arg0, %c0_i32, %c0_i32_0 : i32, i32, i32
  }
}

</mosaic_0001>

<llo_original>
// kernel: scnet_down_forward.2
$region0: #{scnet_down_forward.2}
  #allocation0 [shape = 'u32[]', space=smem, size = 0x4, offset = 0x4, fixed_abs, tag = 'smem constant byte address 0x4 - core index']
  #allocation1 [shape = 'u32[144,128]{1,0:T(1,128)}', space=vmem, size = 0x12000, scoped, tag = 'internal scratch']
  %s0 = inlined_call_operand.vmem [shape: bf16[2,72,64], index: 0, kind: input, shape index: {}]
  %s1 = inlined_call_operand.vmem [shape: bf16[8,72], index: 1, kind: input, shape index: {}]
  %s2 = inlined_call_operand.vmem [shape: f32[8,1], index: 2, kind: input, shape index: {}]
  %s3 = inlined_call_operand.vmem [shape: f32[2,8,64], index: 3, kind: output, shape index: {}]
  %s4 = sld [smem:[#allocation0]]
  $region45: #{scnet_down_forward.2} parent=0
    _
  %s6 = ssub.s32 1, %s4
  %s7 = scalar_select 0, %s6, %s4
  loop: start=0, step=1, limit=4
  $region2: #{scnet_down_forward.2} parent=0 // loop_pre_header
    _
  $region3: #{scnet_down_forward.2} parent=0 // loop_header
    %s9 = sphi 0, %s13
    %p10 = scmp.ge.s32.totalorder %s9, 4
    %s19 = sphi 0, %s21
    %s22 = sphi 0, %s19
    %s23 = sphi 0, %s22
    %s39 = sphi 0, %s23
    %s43 = sphi 0, %s43
    %s45 = sphi 0, %s43
    %s46 = sphi 0, %s45
    %s60 = sphi 0, %s46
    %s64 = sphi 0, %s64
    %s66 = sphi 0, %s64
    %s67 = sphi 0, %s66
    %s81 = sphi 0, %s67
    %s87 = sphi 0, %s89
    %s90 = sphi 0, %s87
    %s91 = sphi 0, %s90
    %s107 = sphi 0, %s91
  $region4: #{scnet_down_forward.2} parent=0 // loop_header_branch
    %12 = sbr.rel (%p10) target = $region8
  $region5: #{scnet_down_forward.2} parent=0 // loop_body
    %s14 = ssub.s32 %s9, 1
    %s15 = ssub.s32 %s9, 2
    %s16 = sadd.s32 %s9, 1
    %s17 = ssub.s32 %s9, %s16
    %p18 = scmp.eq.s32.totalorder %s17, 0
    %s20 = sadd.s32 %s19, 1
    %s21 = scalar_select %p18, %s19, %s20
    %p24 = pneg %p18
    %p25 = scmp.eq.s32.totalorder %s9, 1
    %p26 = por %p24, %p25
    %p27 = scmp.ne.s32.totalorder %s19, %s22
    %p28 = scmp.eq.s32.totalorder %s9, 0
    %p29 = por %p27, %p28
    %p30 = scmp.ne.s32.totalorder %s19, %s22
    %p31 = scmp.eq.s32.totalorder %s14, 1
    %p32 = por %p30, %p31
    %p33 = scmp.ne.s32.totalorder %s22, %s23
    %p34 = scmp.eq.s32.totalorder %s14, 0
    %p35 = por %p33, %p34
    %p36 = scmp.ne.s32.totalorder %s22, %s23
    %p37 = scmp.eq.s32.totalorder %s15, 1
    %p38 = por %p36, %p37
    %p40 = scmp.ne.s32.totalorder %s23, %s39
    %p41 = scmp.eq.s32.totalorder %s15, 0
    %p42 = por %p40, %p41
    %s44 = sadd.s32 %s43, 1
    %p47 = scmp.eq.s32.totalorder %s9, 1
    %p48 = scmp.ne.s32.totalorder %s43, %s45
    %p49 = scmp.eq.s32.totalorder %s9, 0
    %p50 = por %p48, %p49
    %p51 = scmp.ne.s32.totalorder %s43, %s45
    %p52 = scmp.eq.s32.totalorder %s14, 1
    %p53 = por %p51, %p52
    %p54 = scmp.ne.s32.totalorder %s45, %s46
    %p55 = scmp.eq.s32.totalorder %s14, 0
    %p56 = por %p54, %p55
    %p57 = scmp.ne.s32.totalorder %s45, %s46
    %p58 = scmp.eq.s32.totalorder %s15, 1
    %p59 = por %p57, %p58
    %p61 = scmp.ne.s32.totalorder %s46, %s60
    %p62 = scmp.eq.s32.totalorder %s15, 0
    %p63 = por %p61, %p62
    %s65 = sadd.s32 %s64, 1
    %p68 = scmp.eq.s32.totalorder %s9, 1
    %p69 = scmp.ne.s32.totalorder %s64, %s66
    %p70 = scmp.eq.s32.totalorder %s9, 0
    %p71 = por %p69, %p70
    %p72 = scmp.ne.s32.totalorder %s64, %s66
    %p73 = scmp.eq.s32.totalorder %s14, 1
    %p74 = por %p72, %p73
    %p75 = scmp.ne.s32.totalorder %s66, %s67
    %p76 = scmp.eq.s32.totalorder %s14, 0
    %p77 = por %p75, %p76
    %p78 = scmp.ne.s32.totalorder %s66, %s67
    %p79 = scmp.eq.s32.totalorder %s15, 1
    %p80 = por %p78, %p79
    %p82 = scmp.ne.s32.totalorder %s67, %s81
    %p83 = scmp.eq.s32.totalorder %s15, 0
    %p84 = por %p82, %p83
    %s85 = ssub.s32 %s9, %s16
    %p86 = scmp.eq.s32.totalorder %s85, 0
    %s88 = sadd.s32 %s87, 1
    %s89 = scalar_select %p86, %s87, %s88
    %p92 = pneg %p86
    %p93 = scmp.eq.s32.totalorder %s9, 1
    %p94 = por %p92, %p93
    %p95 = scmp.ne.s32.totalorder %s87, %s90
    %p96 = scmp.eq.s32.totalorder %s9, 0
    %p97 = por %p95, %p96
    %p98 = scmp.ne.s32.totalorder %s87, %s90
    %p99 = scmp.eq.s32.totalorder %s14, 1
    %p100 = por %p98, %p99
    %p101 = scmp.ne.s32.totalorder %s90, %s91
    %p102 = scmp.eq.s32.totalorder %s14, 0
    %p103 = por %p101, %p102
    %p104 = scmp.ne.s32.totalorder %s90, %s91
    %p105 = scmp.eq.s32.totalorder %s15, 1
    %p106 = por %p104, %p105
    %p108 = scmp.ne.s32.totalorder %s91, %s107
    %p109 = scmp.eq.s32.totalorder %s15, 0
    %p110 = por %p108, %p109
    %p111 = scmp.le.s32.totalorder 1, %s9
    %p112 = scmp.lt.s32.totalorder %s9, 3
    %p113 = pnand %p111, %p112
    %p114 = pneg %p113
    // Predicated region
    $region9: #{scnet_down_forward.2} parent=5 // pred_check
      _
    $region10: #{scnet_down_forward.2} parent=5 // pred_check_branch
      %116 = sbr.rel (%p113) target = $region12
    $region11: #{scnet_down_forward.2} parent=5 // pred_region
      %s117 = ssub.s32 %s9, 1
      // Predicated region
      $region13: #{scnet_down_forward.2} parent=11 // pred_check
        %p118 = pneg %p56
      $region14: #{scnet_down_forward.2} parent=11 // pred_check_branch
        %120 = sbr.rel (%p118) target = $region16
      $region15: #{scnet_down_forward.2} parent=11 // pred_region
        _
      $region16: #{scnet_down_forward.2} parent=11 // pred_fallthru
        _
      // Predicated region
      $region17: #{scnet_down_forward.2} parent=11 // pred_check
        %p121 = pneg %p77
      $region18: #{scnet_down_forward.2} parent=11 // pred_check_branch
        %123 = sbr.rel (%p121) target = $region20
      $region19: #{scnet_down_forward.2} parent=11 // pred_region
        _
      $region20: #{scnet_down_forward.2} parent=11 // pred_fallthru
        _
    $region12: #{scnet_down_forward.2} parent=5 // pred_fallthru
      _
    %p124 = scmp.lt.s32.totalorder %s9, 2
    // Predicated region
    $region21: #{scnet_down_forward.2} parent=5 // pred_check
      %p125 = pneg %p124
    $region22: #{scnet_down_forward.2} parent=5 // pred_check_branch
      %127 = sbr.rel (%p125) target = $region24
    $region23: #{scnet_down_forward.2} parent=5 // pred_region
      // Predicated region
      $region25: #{scnet_down_forward.2} parent=23 // pred_check
        %p128 = pneg %p29
      $region26: #{scnet_down_forward.2} parent=23 // pred_check_branch
        %130 = sbr.rel (%p128) target = $region28
      $region27: #{scnet_down_forward.2} parent=23 // pred_region
        %p131 = scmp.lt.s32.totalorder %s9, 1
        %s132 = scalar_select %p131, %s9, 1
        %s133 = smul.addr %s132, 9
        %s134 = smul.addr %s133, 4
        %s135 = scalar_lea.vmem %s0, %s134
      $region28: #{scnet_down_forward.2} parent=23 // pred_fallthru
        _
    $region24: #{scnet_down_forward.2} parent=5 // pred_fallthru
      _
    %p136 = scmp.le.s32.totalorder 1, %s9
    %p137 = scmp.lt.s32.totalorder %s9, 3
    %p138 = pnand %p136, %p137
    %p139 = pneg %p138
    // Predicated region
    $region29: #{scnet_down_forward.2} parent=5 // pred_check
      _
    $region30: #{scnet_down_forward.2} parent=5 // pred_check_branch
      %141 = sbr.rel (%p138) target = $region32
    $region31: #{scnet_down_forward.2} parent=5 // pred_region
      %s142 = ssub.s32 %s9, 1
      %p143 = scmp.lt.s32.totalorder %s14, 1
      %s144 = scalar_select %p143, %s14, 1
      %s145 = smul.addr %s144, 9
      %s146 = smul.addr %s145, 4
      %s147 = scalar_lea.vmem %s0, %s146
      %p148 = pneg %p35
      %p149 = pneg %p32
      %p150 = pneg %p56
      %p151 = pneg %p53
      %p152 = pneg %p77
      %p153 = pneg %p74
      %p154 = pneg %p103
      %p155 = pneg %p100
      %p156 = scmp.lt.s32.totalorder %s14, 1
      %s157 = scalar_select %p156, %s14, 1
      %s158 = smul.addr %s157, 8
      %s159 = scalar_lea.vmem %s3, %s158
      %p160 = scmp.lt.s32.totalorder %s14, 1
      %s161 = scalar_select %p160, %s14, 1
      %s162 = smul.addr %s161, 9
      %s163 = smul.addr %s162, 4
      %s164 = scalar_lea.vmem %s0, %s163
      %p165 = scmp.lt.s32.totalorder %s14, 1
      %s166 = scalar_select %p165, %s14, 1
      %s167 = smul.addr %s166, 8
      %s168 = scalar_lea.vmem %s3, %s167
      %v170 = vld [vmem:[%s1] sm:$0xf]
      %v171 = vld [vmem:[%s164] sm:$0xf]
      %v172 = vld [vmem:[%s164 + $0x4] sm:$0xf]
      %v173 = vld [vmem:[%s164 + $0x8] sm:$0xf]
      %v174 = vld [vmem:[%s164 + $0xc] sm:$0xf]
      %v175 = vld [vmem:[%s164 + $0x10] sm:$0xf]
      %v176 = vld [vmem:[%s164 + $0x14] sm:$0xf]
      %v177 = vld [vmem:[%s164 + $0x18] sm:$0xf]
      %v178 = vld [vmem:[%s164 + $0x1c] sm:$0xf]
      %v179 = vld [vmem:[%s164 + $0x20] sm:$0xf]
      %v180 = vld [vmem:[%s2] sm:$0xff]
      %182 = vset.pattern.permute.xlu0 0
      %183 = vperm.xlu0 %182, %v180
      %v184 = vpop.permute.xlu0 %183
      %v195 = vunpack.c.l.b16 %v171
      %v196 = vunpack.c.l.b16 %v172
      %v197 = vunpack.c.l.b16 %v173
      %v198 = vunpack.c.l.b16 %v174
      %v199 = vunpack.c.l.b16 %v175
      %v200 = vunpack.c.l.b16 %v176
      %v201 = vunpack.c.l.b16 %v177
      %v202 = vunpack.c.l.b16 %v178
      %v203 = vunpack.c.l.b16 %v179
      %v204 = vpack.c.b16 %v196, %v195
      %v205 = vpack.c.b16 %v198, %v197
      %v206 = vpack.c.b16 %v200, %v199
      %v207 = vpack.c.b16 %v202, %v201
      %v208 = vpack.c.b16 %v203, %v203
      %vm213 = vcmask 588800
      %v215 = vsel %vm213, %v170, 0
      %vm217 = vcmask 1043456
      %v219 = vsel %vm217, %v208, 0
      %221 = vmatprep.subr.bf16.mxu0 0
      %222 = vmatpush1.bf16.msra.mxu0 0
      %223 = vmatprep.subr.bf16.mxu0 0
      %224 = vmatpush1.bf16.msra.mxu0 0
      %225 = vmatprep.subr.bf16.mxu0 0
      %226 = vmatpush1.bf16.msra.mxu0 0
      %227 = vmatprep.subr.bf16.mxu0 0
      %228 = vmatpush1.bf16.msra.mxu0 %v219
      %229 = vmatprep.subr.bf16.mxu0 0
      %230 = vmatpush1.bf16.msra.mxu0 %v207
      %231 = vmatprep.subr.bf16.mxu0 0
      %232 = vmatpush1.bf16.msra.mxu0 %v206
      %233 = vmatprep.subr.bf16.mxu0 0
      %234 = vmatpush1.bf16.msra.mxu0 %v205
      %235 = vmatprep.subr.bf16.mxu0 0
      %236 = vmatpush1.bf16.msra.mxu0 %v204
      %237 = vmatprep.subr.bf16.mxu0 0
      %238 = vmatpush2.bf16.msra.mxu0 0
      %239 = vmatprep.subr.bf16.mxu0 0
      %240 = vmatpush2.bf16.msra.mxu0 0
      %241 = vmatprep.subr.bf16.mxu0 0
      %242 = vmatpush2.bf16.msra.mxu0 0
      %243 = vmatprep.subr.bf16.mxu0 0
      %244 = vmatpush2.bf16.msra.mxu0 0
      %245 = vmatprep.subr.bf16.mxu0 0
      %246 = vmatpush2.bf16.msra.mxu0 0
      %247 = vmatprep.subr.bf16.mxu0 0
      %248 = vmatpush2.bf16.msra.mxu0 0
      %249 = vmatprep.subr.bf16.mxu0 0
      %250 = vmatpush2.bf16.msra.mxu0 0
      %251 = vmatprep.subr.bf16.mxu0 0
      %252 = vmatpush2.bf16.msra.mxu0 0
      %253 = vmatprep.mubr.bf16.mxu0 0
      %254 = vmatmul.mubr.bf16.gmra.mxu0 %v215
      %v255 = vpop.f32.mrf.mxu0
      %v256 = vadd.f32 %v184, %v255
      %v257 = vpop.f32.mrf.mxu0
      %v258 = vpop.f32.mrf.mxu0
      %v259 = vpop.f32.mrf.mxu0
      %260 = vdwg.mxu0
      %v261 = vmax.f32 %v256, 0.0
      %vm262 = vcmask 523264
      %263 = vst.msk [vmem:[%s168] sm:$0xff] %vm262, %v261
      %p264 = scmp.lt.s32.totalorder %s14, 1
      %s265 = scalar_select %p264, %s14, 1
      %s266 = smul.addr %s265, 8
      %s267 = scalar_lea.vmem %s3, %s266
      // Predicated region
      $region33: #{scnet_down_forward.2} parent=31 // pred_check
        %p268 = pneg %p100
      $region34: #{scnet_down_forward.2} parent=31 // pred_check_branch
        %270 = sbr.rel (%p268) target = $region36
      $region35: #{scnet_down_forward.2} parent=31 // pred_region
        _
      $region36: #{scnet_down_forward.2} parent=31 // pred_fallthru
        _
    $region32: #{scnet_down_forward.2} parent=5 // pred_fallthru
      _
    %p271 = scmp.le.s32.totalorder 2, %s9
    // Predicated region
    $region37: #{scnet_down_forward.2} parent=5 // pred_check
      %p272 = pneg %p271
    $region38: #{scnet_down_forward.2} parent=5 // pred_check_branch
      %274 = sbr.rel (%p272) target = $region40
    $region39: #{scnet_down_forward.2} parent=5 // pred_region
      %s275 = ssub.s32 %s9, 2
      // Predicated region
      $region41: #{scnet_down_forward.2} parent=39 // pred_check
        %p276 = pneg %p106
      $region42: #{scnet_down_forward.2} parent=39 // pred_check_branch
        %278 = sbr.rel (%p276) target = $region44
      $region43: #{scnet_down_forward.2} parent=39 // pred_region
        %p279 = scmp.lt.s32.totalorder %s15, 1
        %s280 = scalar_select %p279, %s15, 1
        %s281 = smul.addr %s280, 8
        %s282 = scalar_lea.vmem %s3, %s281
      $region44: #{scnet_down_forward.2} parent=39 // pred_fallthru
        _
    $region40: #{scnet_down_forward.2} parent=5 // pred_fallthru
      _
  $region6: #{scnet_down_forward.2} parent=0 // loop_footer
    %s13 = sadd.s32 1, %s9
  $region7: #{scnet_down_forward.2} parent=0 // loop_footer_branch
    %8 = sbr.rel target = $region3
  $region8: #{scnet_down_forward.2} parent=0 // loop_exit
    _

// kernel: scnet_down_forward.3
$region0: #{scnet_down_forward.3}
  #allocation0 [shape = 'u32[]', space=smem, size = 0x4, offset = 0x4, fixed_abs, tag = 'smem constant byte address 0x4 - core index']
  #allocation1 [shape = 'u32[144,128]{1,0:T(1,128)}', space=vmem, size = 0x12000, scoped, tag = 'internal scratch']
  %s0 = inlined_call_operand.vmem [shape: f32[2,8,64], index: 0, kind: input, shape index: {}, may-alias: {0,17}]
  %s1 = inlined_call_operand.vmem [shape: bf16[4,8], index: 1, kind: input, shape index: {}]
  %s2 = inlined_call_operand.vmem [shape: f32[4,1], index: 2, kind: input, shape index: {}]
  %s3 = inlined_call_operand.vmem [shape: bf16[4,8], index: 3, kind: input, shape index: {}]
  %s4 = inlined_call_operand.vmem [shape: f32[4,1], index: 4, kind: input, shape index: {}]
  %s5 = inlined_call_operand.vmem [shape: bf16[4,36], index: 5, kind: input, shape index: {}]
  %s6 = inlined_call_operand.vmem [shape: f32[4,1], index: 6, kind: input, shape index: {}]
  %s7 = inlined_call_operand.vmem [shape: bf16[4,36], index: 7, kind: input, shape index: {}]
  %s8 = inlined_call_operand.vmem [shape: f32[4,1], index: 8, kind: input, shape index: {}]
  %s9 = inlined_call_operand.vmem [shape: bf16[4,36], index: 9, kind: input, shape index: {}]
  %s10 = inlined_call_operand.vmem [shape: f32[4,1], index: 10, kind: input, shape index: {}]
  %s11 = inlined_call_operand.vmem [shape: bf16[4,36], index: 11, kind: input, shape index: {}]
  %s12 = inlined_call_operand.vmem [shape: f32[4,1], index: 12, kind: input, shape index: {}]
  %s13 = inlined_call_operand.vmem [shape: bf16[8,8], index: 13, kind: input, shape index: {}]
  %s14 = inlined_call_operand.vmem [shape: f32[8,1], index: 14, kind: input, shape index: {}]
  %s15 = inlined_call_operand.vmem [shape: bf16[64,4], index: 15, kind: input, shape index: {}]
  %s16 = inlined_call_operand.vmem [shape: bf16[4,64], index: 16, kind: input, shape index: {}]
  %s17 = inlined_call_operand.vmem [shape: f32[2,8,64], index: 17, kind: output, shape index: {}, may-alias: {0,17}]
  %s18 = sld [smem:[#allocation0]]
  $region101: #{scnet_down_forward.3} parent=0
    _
  %s20 = ssub.s32 1, %s18
  %s21 = scalar_select 0, %s20, %s18
  loop: start=0, step=1, limit=4
  $region2: #{scnet_down_forward.3} parent=0 // loop_pre_header
    _
  $region3: #{scnet_down_forward.3} parent=0 // loop_header
    %s23 = sphi 0, %s27
    %p24 = scmp.ge.s32.totalorder %s23, 4
    %s33 = sphi 0, %s35
    %s36 = sphi 0, %s33
    %s37 = sphi 0, %s36
    %s53 = sphi 0, %s37
    %s57 = sphi 0, %s57
    %s59 = sphi 0, %s57
    %s60 = sphi 0, %s59
    %s74 = sphi 0, %s60
    %s78 = sphi 0, %s78
    %s80 = sphi 0, %s78
    %s81 = sphi 0, %s80
    %s95 = sphi 0, %s81
    %s99 = sphi 0, %s99
    %s101 = sphi 0, %s99
    %s102 = sphi 0, %s101
    %s116 = sphi 0, %s102
    %s120 = sphi 0, %s120
    %s122 = sphi 0, %s120
    %s123 = sphi 0, %s122
    %s137 = sphi 0, %s123
    %s141 = sphi 0, %s141
    %s143 = sphi 0, %s141
    %s144 = sphi 0, %s143
    %s158 = sphi 0, %s144
    %s162 = sphi 0, %s162
    %s164 = sphi 0, %s162
    %s165 = sphi 0, %s164
    %s179 = sphi 0, %s165
    %s183 = sphi 0, %s183
    %s185 = sphi 0, %s183
    %s186 = sphi 0, %s185
    %s200 = sphi 0, %s186
    %s204 = sphi 0, %s204
    %s206 = sphi 0, %s204
    %s207 = sphi 0, %s206
    %s221 = sphi 0, %s207
    %s225 = sphi 0, %s225
    %s227 = sphi 0, %s225
    %s228 = sphi 0, %s227
    %s242 = sphi 0, %s228
    %s246 = sphi 0, %s246
    %s248 = sphi 0, %s246
    %s249 = sphi 0, %s248
    %s263 = sphi 0, %s249
    %s267 = sphi 0, %s267
    %s269 = sphi 0, %s267
    %s270 = sphi 0, %s269
    %s284 = sphi 0, %s270
    %s288 = sphi 0, %s288
    %s290 = sphi 0, %s288
    %s291 = sphi 0, %s290
    %s305 = sphi 0, %s291
    %s309 = sphi 0, %s309
    %s311 = sphi 0, %s309
    %s312 = sphi 0, %s311
    %s326 = sphi 0, %s312
    %s330 = sphi 0, %s330
    %s332 = sphi 0, %s330
    %s333 = sphi 0, %s332
    %s347 = sphi 0, %s333
    %s351 = sphi 0, %s351
    %s353 = sphi 0, %s351
    %s354 = sphi 0, %s353
    %s368 = sphi 0, %s354
    %s372 = sphi 0, %s372
    %s374 = sphi 0, %s372
    %s375 = sphi 0, %s374
    %s389 = sphi 0, %s375
    %s395 = sphi 0, %s397
    %s398 = sphi 0, %s395
    %s399 = sphi 0, %s398
    %s415 = sphi 0, %s399
  $region4: #{scnet_down_forward.3} parent=0 // loop_header_branch
    %26 = sbr.rel (%p24) target = $region8
  $region5: #{scnet_down_forward.3} parent=0 // loop_body
    %s28 = ssub.s32 %s23, 1
    %s29 = ssub.s32 %s23, 2
    %s30 = sadd.s32 %s23, 1
    %s31 = ssub.s32 %s23, %s30
    %p32 = scmp.eq.s32.totalorder %s31, 0
    %s34 = sadd.s32 %s33, 1
    %s35 = scalar_select %p32, %s33, %s34
    %p38 = pneg %p32
    %p39 = scmp.eq.s32.totalorder %s23, 1
    %p40 = por %p38, %p39
    %p41 = scmp.ne.s32.totalorder %s33, %s36
    %p42 = scmp.eq.s32.totalorder %s23, 0
    %p43 = por %p41, %p42
    %p44 = scmp.ne.s32.totalorder %s33, %s36
    %p45 = scmp.eq.s32.totalorder %s28, 1
    %p46 = por %p44, %p45
    %p47 = scmp.ne.s32.totalorder %s36, %s37
    %p48 = scmp.eq.s32.totalorder %s28, 0
    %p49 = por %p47, %p48
    %p50 = scmp.ne.s32.totalorder %s36, %s37
    %p51 = scmp.eq.s32.totalorder %s29, 1
    %p52 = por %p50, %p51
    %p54 = scmp.ne.s32.totalorder %s37, %s53
    %p55 = scmp.eq.s32.totalorder %s29, 0
    %p56 = por %p54, %p55
    %s58 = sadd.s32 %s57, 1
    %p61 = scmp.eq.s32.totalorder %s23, 1
    %p62 = scmp.ne.s32.totalorder %s57, %s59
    %p63 = scmp.eq.s32.totalorder %s23, 0
    %p64 = por %p62, %p63
    %p65 = scmp.ne.s32.totalorder %s57, %s59
    %p66 = scmp.eq.s32.totalorder %s28, 1
    %p67 = por %p65, %p66
    %p68 = scmp.ne.s32.totalorder %s59, %s60
    %p69 = scmp.eq.s32.totalorder %s28, 0
    %p70 = por %p68, %p69
    %p71 = scmp.ne.s32.totalorder %s59, %s60
    %p72 = scmp.eq.s32.totalorder %s29, 1
    %p73 = por %p71, %p72
    %p75 = scmp.ne.s32.totalorder %s60, %s74
    %p76 = scmp.eq.s32.totalorder %s29, 0
    %p77 = por %p75, %p76
    %s79 = sadd.s32 %s78, 1
    %p82 = scmp.eq.s32.totalorder %s23, 1
    %p83 = scmp.ne.s32.totalorder %s78, %s80
    %p84 = scmp.eq.s32.totalorder %s23, 0
    %p85 = por %p83, %p84
    %p86 = scmp.ne.s32.totalorder %s78, %s80
    %p87 = scmp.eq.s32.totalorder %s28, 1
    %p88 = por %p86, %p87
    %p89 = scmp.ne.s32.totalorder %s80, %s81
    %p90 = scmp.eq.s32.totalorder %s28, 0
    %p91 = por %p89, %p90
    %p92 = scmp.ne.s32.totalorder %s80, %s81
    %p93 = scmp.eq.s32.totalorder %s29, 1
    %p94 = por %p92, %p93
    %p96 = scmp.ne.s32.totalorder %s81, %s95
    %p97 = scmp.eq.s32.totalorder %s29, 0
    %p98 = por %p96, %p97
    %s100 = sadd.s32 %s99, 1
    %p103 = scmp.eq.s32.totalorder %s23, 1
    %p104 = scmp.ne.s32.totalorder %s99, %s101
    %p105 = scmp.eq.s32.totalorder %s23, 0
    %p106 = por %p104, %p105
    %p107 = scmp.ne.s32.totalorder %s99, %s101
    %p108 = scmp.eq.s32.totalorder %s28, 1
    %p109 = por %p107, %p108
    %p110 = scmp.ne.s32.totalorder %s101, %s102
    %p111 = scmp.eq.s32.totalorder %s28, 0
    %p112 = por %p110, %p111
    %p113 = scmp.ne.s32.totalorder %s101, %s102
    %p114 = scmp.eq.s32.totalorder %s29, 1
    %p115 = por %p113, %p114
    %p117 = scmp.ne.s32.totalorder %s102, %s116
    %p118 = scmp.eq.s32.totalorder %s29, 0
    %p119 = por %p117, %p118
    %s121 = sadd.s32 %s120, 1
    %p124 = scmp.eq.s32.totalorder %s23, 1
    %p125 = scmp.ne.s32.totalorder %s120, %s122
    %p126 = scmp.eq.s32.totalorder %s23, 0
    %p127 = por %p125, %p126
    %p128 = scmp.ne.s32.totalorder %s120, %s122
    %p129 = scmp.eq.s32.totalorder %s28, 1
    %p130 = por %p128, %p129
    %p131 = scmp.ne.s32.totalorder %s122, %s123
    %p132 = scmp.eq.s32.totalorder %s28, 0
    %p133 = por %p131, %p132
    %p134 = scmp.ne.s32.totalorder %s122, %s123
    %p135 = scmp.eq.s32.totalorder %s29, 1
    %p136 = por %p134, %p135
    %p138 = scmp.ne.s32.totalorder %s123, %s137
    %p139 = scmp.eq.s32.totalorder %s29, 0
    %p140 = por %p138, %p139
    %s142 = sadd.s32 %s141, 1
    %p145 = scmp.eq.s32.totalorder %s23, 1
    %p146 = scmp.ne.s32.totalorder %s141, %s143
    %p147 = scmp.eq.s32.totalorder %s23, 0
    %p148 = por %p146, %p147
    %p149 = scmp.ne.s32.totalorder %s141, %s143
    %p150 = scmp.eq.s32.totalorder %s28, 1
    %p151 = por %p149, %p150
    %p152 = scmp.ne.s32.totalorder %s143, %s144
    %p153 = scmp.eq.s32.totalorder %s28, 0
    %p154 = por %p152, %p153
    %p155 = scmp.ne.s32.totalorder %s143, %s144
    %p156 = scmp.eq.s32.totalorder %s29, 1
    %p157 = por %p155, %p156
    %p159 = scmp.ne.s32.totalorder %s144, %s158
    %p160 = scmp.eq.s32.totalorder %s29, 0
    %p161 = por %p159, %p160
    %s163 = sadd.s32 %s162, 1
    %p166 = scmp.eq.s32.totalorder %s23, 1
    %p167 = scmp.ne.s32.totalorder %s162, %s164
    %p168 = scmp.eq.s32.totalorder %s23, 0
    %p169 = por %p167, %p168
    %p170 = scmp.ne.s32.totalorder %s162, %s164
    %p171 = scmp.eq.s32.totalorder %s28, 1
    %p172 = por %p170, %p171
    %p173 = scmp.ne.s32.totalorder %s164, %s165
    %p174 = scmp.eq.s32.totalorder %s28, 0
    %p175 = por %p173, %p174
    %p176 = scmp.ne.s32.totalorder %s164, %s165
    %p177 = scmp.eq.s32.totalorder %s29, 1
    %p178 = por %p176, %p177
    %p180 = scmp.ne.s32.totalorder %s165, %s179
    %p181 = scmp.eq.s32.totalorder %s29, 0
    %p182 = por %p180, %p181
    %s184 = sadd.s32 %s183, 1
    %p187 = scmp.eq.s32.totalorder %s23, 1
    %p188 = scmp.ne.s32.totalorder %s183, %s185
    %p189 = scmp.eq.s32.totalorder %s23, 0
    %p190 = por %p188, %p189
    %p191 = scmp.ne.s32.totalorder %s183, %s185
    %p192 = scmp.eq.s32.totalorder %s28, 1
    %p193 = por %p191, %p192
    %p194 = scmp.ne.s32.totalorder %s185, %s186
    %p195 = scmp.eq.s32.totalorder %s28, 0
    %p196 = por %p194, %p195
    %p197 = scmp.ne.s32.totalorder %s185, %s186
    %p198 = scmp.eq.s32.totalorder %s29, 1
    %p199 = por %p197, %p198
    %p201 = scmp.ne.s32.totalorder %s186, %s200
    %p202 = scmp.eq.s32.totalorder %s29, 0
    %p203 = por %p201, %p202
    %s205 = sadd.s32 %s204, 1
    %p208 = scmp.eq.s32.totalorder %s23, 1
    %p209 = scmp.ne.s32.totalorder %s204, %s206
    %p210 = scmp.eq.s32.totalorder %s23, 0
    %p211 = por %p209, %p210
    %p212 = scmp.ne.s32.totalorder %s204, %s206
    %p213 = scmp.eq.s32.totalorder %s28, 1
    %p214 = por %p212, %p213
    %p215 = scmp.ne.s32.totalorder %s206, %s207
    %p216 = scmp.eq.s32.totalorder %s28, 0
    %p217 = por %p215, %p216
    %p218 = scmp.ne.s32.totalorder %s206, %s207
    %p219 = scmp.eq.s32.totalorder %s29, 1
    %p220 = por %p218, %p219
    %p222 = scmp.ne.s32.totalorder %s207, %s221
    %p223 = scmp.eq.s32.totalorder %s29, 0
    %p224 = por %p222, %p223
    %s226 = sadd.s32 %s225, 1
    %p229 = scmp.eq.s32.totalorder %s23, 1
    %p230 = scmp.ne.s32.totalorder %s225, %s227
    %p231 = scmp.eq.s32.totalorder %s23, 0
    %p232 = por %p230, %p231
    %p233 = scmp.ne.s32.totalorder %s225, %s227
    %p234 = scmp.eq.s32.totalorder %s28, 1
    %p235 = por %p233, %p234
    %p236 = scmp.ne.s32.totalorder %s227, %s228
    %p237 = scmp.eq.s32.totalorder %s28, 0
    %p238 = por %p236, %p237
    %p239 = scmp.ne.s32.totalorder %s227, %s228
    %p240 = scmp.eq.s32.totalorder %s29, 1
    %p241 = por %p239, %p240
    %p243 = scmp.ne.s32.totalorder %s228, %s242
    %p244 = scmp.eq.s32.totalorder %s29, 0
    %p245 = por %p243, %p244
    %s247 = sadd.s32 %s246, 1
    %p250 = scmp.eq.s32.totalorder %s23, 1
    %p251 = scmp.ne.s32.totalorder %s246, %s248
    %p252 = scmp.eq.s32.totalorder %s23, 0
    %p253 = por %p251, %p252
    %p254 = scmp.ne.s32.totalorder %s246, %s248
    %p255 = scmp.eq.s32.totalorder %s28, 1
    %p256 = por %p254, %p255
    %p257 = scmp.ne.s32.totalorder %s248, %s249
    %p258 = scmp.eq.s32.totalorder %s28, 0
    %p259 = por %p257, %p258
    %p260 = scmp.ne.s32.totalorder %s248, %s249
    %p261 = scmp.eq.s32.totalorder %s29, 1
    %p262 = por %p260, %p261
    %p264 = scmp.ne.s32.totalorder %s249, %s263
    %p265 = scmp.eq.s32.totalorder %s29, 0
    %p266 = por %p264, %p265
    %s268 = sadd.s32 %s267, 1
    %p271 = scmp.eq.s32.totalorder %s23, 1
    %p272 = scmp.ne.s32.totalorder %s267, %s269
    %p273 = scmp.eq.s32.totalorder %s23, 0
    %p274 = por %p272, %p273
    %p275 = scmp.ne.s32.totalorder %s267, %s269
    %p276 = scmp.eq.s32.totalorder %s28, 1
    %p277 = por %p275, %p276
    %p278 = scmp.ne.s32.totalorder %s269, %s270
    %p279 = scmp.eq.s32.totalorder %s28, 0
    %p280 = por %p278, %p279
    %p281 = scmp.ne.s32.totalorder %s269, %s270
    %p282 = scmp.eq.s32.totalorder %s29, 1
    %p283 = por %p281, %p282
    %p285 = scmp.ne.s32.totalorder %s270, %s284
    %p286 = scmp.eq.s32.totalorder %s29, 0
    %p287 = por %p285, %p286
    %s289 = sadd.s32 %s288, 1
    %p292 = scmp.eq.s32.totalorder %s23, 1
    %p293 = scmp.ne.s32.totalorder %s288, %s290
    %p294 = scmp.eq.s32.totalorder %s23, 0
    %p295 = por %p293, %p294
    %p296 = scmp.ne.s32.totalorder %s288, %s290
    %p297 = scmp.eq.s32.totalorder %s28, 1
    %p298 = por %p296, %p297
    %p299 = scmp.ne.s32.totalorder %s290, %s291
    %p300 = scmp.eq.s32.totalorder %s28, 0
    %p301 = por %p299, %p300
    %p302 = scmp.ne.s32.totalorder %s290, %s291
    %p303 = scmp.eq.s32.totalorder %s29, 1
    %p304 = por %p302, %p303
    %p306 = scmp.ne.s32.totalorder %s291, %s305
    %p307 = scmp.eq.s32.totalorder %s29, 0
    %p308 = por %p306, %p307
    %s310 = sadd.s32 %s309, 1
    %p313 = scmp.eq.s32.totalorder %s23, 1
    %p314 = scmp.ne.s32.totalorder %s309, %s311
    %p315 = scmp.eq.s32.totalorder %s23, 0
    %p316 = por %p314, %p315
    %p317 = scmp.ne.s32.totalorder %s309, %s311
    %p318 = scmp.eq.s32.totalorder %s28, 1
    %p319 = por %p317, %p318
    %p320 = scmp.ne.s32.totalorder %s311, %s312
    %p321 = scmp.eq.s32.totalorder %s28, 0
    %p322 = por %p320, %p321
    %p323 = scmp.ne.s32.totalorder %s311, %s312
    %p324 = scmp.eq.s32.totalorder %s29, 1
    %p325 = por %p323, %p324
    %p327 = scmp.ne.s32.totalorder %s312, %s326
    %p328 = scmp.eq.s32.totalorder %s29, 0
    %p329 = por %p327, %p328
    %s331 = sadd.s32 %s330, 1
    %p334 = scmp.eq.s32.totalorder %s23, 1
    %p335 = scmp.ne.s32.totalorder %s330, %s332
    %p336 = scmp.eq.s32.totalorder %s23, 0
    %p337 = por %p335, %p336
    %p338 = scmp.ne.s32.totalorder %s330, %s332
    %p339 = scmp.eq.s32.totalorder %s28, 1
    %p340 = por %p338, %p339
    %p341 = scmp.ne.s32.totalorder %s332, %s333
    %p342 = scmp.eq.s32.totalorder %s28, 0
    %p343 = por %p341, %p342
    %p344 = scmp.ne.s32.totalorder %s332, %s333
    %p345 = scmp.eq.s32.totalorder %s29, 1
    %p346 = por %p344, %p345
    %p348 = scmp.ne.s32.totalorder %s333, %s347
    %p349 = scmp.eq.s32.totalorder %s29, 0
    %p350 = por %p348, %p349
    %s352 = sadd.s32 %s351, 1
    %p355 = scmp.eq.s32.totalorder %s23, 1
    %p356 = scmp.ne.s32.totalorder %s351, %s353
    %p357 = scmp.eq.s32.totalorder %s23, 0
    %p358 = por %p356, %p357
    %p359 = scmp.ne.s32.totalorder %s351, %s353
    %p360 = scmp.eq.s32.totalorder %s28, 1
    %p361 = por %p359, %p360
    %p362 = scmp.ne.s32.totalorder %s353, %s354
    %p363 = scmp.eq.s32.totalorder %s28, 0
    %p364 = por %p362, %p363
    %p365 = scmp.ne.s32.totalorder %s353, %s354
    %p366 = scmp.eq.s32.totalorder %s29, 1
    %p367 = por %p365, %p366
    %p369 = scmp.ne.s32.totalorder %s354, %s368
    %p370 = scmp.eq.s32.totalorder %s29, 0
    %p371 = por %p369, %p370
    %s373 = sadd.s32 %s372, 1
    %p376 = scmp.eq.s32.totalorder %s23, 1
    %p377 = scmp.ne.s32.totalorder %s372, %s374
    %p378 = scmp.eq.s32.totalorder %s23, 0
    %p379 = por %p377, %p378
    %p380 = scmp.ne.s32.totalorder %s372, %s374
    %p381 = scmp.eq.s32.totalorder %s28, 1
    %p382 = por %p380, %p381
    %p383 = scmp.ne.s32.totalorder %s374, %s375
    %p384 = scmp.eq.s32.totalorder %s28, 0
    %p385 = por %p383, %p384
    %p386 = scmp.ne.s32.totalorder %s374, %s375
    %p387 = scmp.eq.s32.totalorder %s29, 1
    %p388 = por %p386, %p387
    %p390 = scmp.ne.s32.totalorder %s375, %s389
    %p391 = scmp.eq.s32.totalorder %s29, 0
    %p392 = por %p390, %p391
    %s393 = ssub.s32 %s23, %s30
    %p394 = scmp.eq.s32.totalorder %s393, 0
    %s396 = sadd.s32 %s395, 1
    %s397 = scalar_select %p394, %s395, %s396
    %p400 = pneg %p394
    %p401 = scmp.eq.s32.totalorder %s23, 1
    %p402 = por %p400, %p401
    %p403 = scmp.ne.s32.totalorder %s395, %s398
    %p404 = scmp.eq.s32.totalorder %s23, 0
    %p405 = por %p403, %p404
    %p406 = scmp.ne.s32.totalorder %s395, %s398
    %p407 = scmp.eq.s32.totalorder %s28, 1
    %p408 = por %p406, %p407
    %p409 = scmp.ne.s32.totalorder %s398, %s399
    %p410 = scmp.eq.s32.totalorder %s28, 0
    %p411 = por %p409, %p410
    %p412 = scmp.ne.s32.totalorder %s398, %s399
    %p413 = scmp.eq.s32.totalorder %s29, 1
    %p414 = por %p412, %p413
    %p416 = scmp.ne.s32.totalorder %s399, %s415
    %p417 = scmp.eq.s32.totalorder %s29, 0
    %p418 = por %p416, %p417
    %p419 = scmp.le.s32.totalorder 1, %s23
    %p420 = scmp.lt.s32.totalorder %s23, 3
    %p421 = pnand %p419, %p420
    %p422 = pneg %p421
    // Predicated region
    $region9: #{scnet_down_forward.3} parent=5 // pred_check
      _
    $region10: #{scnet_down_forward.3} parent=5 // pred_check_branch
      %424 = sbr.rel (%p421) target = $region12
    $region11: #{scnet_down_forward.3} parent=5 // pred_region
      %s425 = ssub.s32 %s23, 1
      // Predicated region
      $region13: #{scnet_down_forward.3} parent=11 // pred_check
        %p426 = pneg %p70
      $region14: #{scnet_down_forward.3} parent=11 // pred_check_branch
        %428 = sbr.rel (%p426) target = $region16
      $region15: #{scnet_down_forward.3} parent=11 // pred_region
        _
      $region16: #{scnet_down_forward.3} parent=11 // pred_fallthru
        _
      // Predicated region
      $region17: #{scnet_down_forward.3} parent=11 // pred_check
        %p429 = pneg %p91
      $region18: #{scnet_down_forward.3} parent=11 // pred_check_branch
        %431 = sbr.rel (%p429) target = $region20
      $region19: #{scnet_down_forward.3} parent=11 // pred_region
        _
      $region20: #{scnet_down_forward.3} parent=11 // pred_fallthru
        _
      // Predicated region
      $region21: #{scnet_down_forward.3} parent=11 // pred_check
        %p432 = pneg %p112
      $region22: #{scnet_down_forward.3} parent=11 // pred_check_branch
        %434 = sbr.rel (%p432) target = $region24
      $region23: #{scnet_down_forward.3} parent=11 // pred_region
        _
      $region24: #{scnet_down_forward.3} parent=11 // pred_fallthru
        _
      // Predicated region
      $region25: #{scnet_down_forward.3} parent=11 // pred_check
        %p435 = pneg %p133
      $region26: #{scnet_down_forward.3} parent=11 // pred_check_branch
        %437 = sbr.rel (%p435) target = $region28
      $region27: #{scnet_down_forward.3} parent=11 // pred_region
        _
      $region28: #{scnet_down_forward.3} parent=11 // pred_fallthru
        _
      // Predicated region
      $region29: #{scnet_down_forward.3} parent=11 // pred_check
        %p438 = pneg %p154
      $region30: #{scnet_down_forward.3} parent=11 // pred_check_branch
        %440 = sbr.rel (%p438) target = $region32
      $region31: #{scnet_down_forward.3} parent=11 // pred_region
        _
      $region32: #{scnet_down_forward.3} parent=11 // pred_fallthru
        _
      // Predicated region
      $region33: #{scnet_down_forward.3} parent=11 // pred_check
        %p441 = pneg %p175
      $region34: #{scnet_down_forward.3} parent=11 // pred_check_branch
        %443 = sbr.rel (%p441) target = $region36
      $region35: #{scnet_down_forward.3} parent=11 // pred_region
        _
      $region36: #{scnet_down_forward.3} parent=11 // pred_fallthru
        _
      // Predicated region
      $region37: #{scnet_down_forward.3} parent=11 // pred_check
        %p444 = pneg %p196
      $region38: #{scnet_down_forward.3} parent=11 // pred_check_branch
        %446 = sbr.rel (%p444) target = $region40
      $region39: #{scnet_down_forward.3} parent=11 // pred_region
        _
      $region40: #{scnet_down_forward.3} parent=11 // pred_fallthru
        _
      // Predicated region
      $region41: #{scnet_down_forward.3} parent=11 // pred_check
        %p447 = pneg %p217
      $region42: #{scnet_down_forward.3} parent=11 // pred_check_branch
        %449 = sbr.rel (%p447) target = $region44
      $region43: #{scnet_down_forward.3} parent=11 // pred_region
        _
      $region44: #{scnet_down_forward.3} parent=11 // pred_fallthru
        _
      // Predicated region
      $region45: #{scnet_down_forward.3} parent=11 // pred_check
        %p450 = pneg %p238
      $region46: #{scnet_down_forward.3} parent=11 // pred_check_branch
        %452 = sbr.rel (%p450) target = $region48
      $region47: #{scnet_down_forward.3} parent=11 // pred_region
        _
      $region48: #{scnet_down_forward.3} parent=11 // pred_fallthru
        _
      // Predicated region
      $region49: #{scnet_down_forward.3} parent=11 // pred_check
        %p453 = pneg %p259
      $region50: #{scnet_down_forward.3} parent=11 // pred_check_branch
        %455 = sbr.rel (%p453) target = $region52
      $region51: #{scnet_down_forward.3} parent=11 // pred_region
        _
      $region52: #{scnet_down_forward.3} parent=11 // pred_fallthru
        _
      // Predicated region
      $region53: #{scnet_down_forward.3} parent=11 // pred_check
        %p456 = pneg %p280
      $region54: #{scnet_down_forward.3} parent=11 // pred_check_branch
        %458 = sbr.rel (%p456) target = $region56
      $region55: #{scnet_down_forward.3} parent=11 // pred_region
        _
      $region56: #{scnet_down_forward.3} parent=11 // pred_fallthru
        _
      // Predicated region
      $region57: #{scnet_down_forward.3} parent=11 // pred_check
        %p459 = pneg %p301
      $region58: #{scnet_down_forward.3} parent=11 // pred_check_branch
        %461 = sbr.rel (%p459) target = $region60
      $region59: #{scnet_down_forward.3} parent=11 // pred_region
        _
      $region60: #{scnet_down_forward.3} parent=11 // pred_fallthru
        _
      // Predicated region
      $region61: #{scnet_down_forward.3} parent=11 // pred_check
        %p462 = pneg %p322
      $region62: #{scnet_down_forward.3} parent=11 // pred_check_branch
        %464 = sbr.rel (%p462) target = $region64
      $region63: #{scnet_down_forward.3} parent=11 // pred_region
        _
      $region64: #{scnet_down_forward.3} parent=11 // pred_fallthru
        _
      // Predicated region
      $region65: #{scnet_down_forward.3} parent=11 // pred_check
        %p465 = pneg %p343
      $region66: #{scnet_down_forward.3} parent=11 // pred_check_branch
        %467 = sbr.rel (%p465) target = $region68
      $region67: #{scnet_down_forward.3} parent=11 // pred_region
        _
      $region68: #{scnet_down_forward.3} parent=11 // pred_fallthru
        _
      // Predicated region
      $region69: #{scnet_down_forward.3} parent=11 // pred_check
        %p468 = pneg %p364
      $region70: #{scnet_down_forward.3} parent=11 // pred_check_branch
        %470 = sbr.rel (%p468) target = $region72
      $region71: #{scnet_down_forward.3} parent=11 // pred_region
        _
      $region72: #{scnet_down_forward.3} parent=11 // pred_fallthru
        _
      // Predicated region
      $region73: #{scnet_down_forward.3} parent=11 // pred_check
        %p471 = pneg %p385
      $region74: #{scnet_down_forward.3} parent=11 // pred_check_branch
        %473 = sbr.rel (%p471) target = $region76
      $region75: #{scnet_down_forward.3} parent=11 // pred_region
        _
      $region76: #{scnet_down_forward.3} parent=11 // pred_fallthru
        _
    $region12: #{scnet_down_forward.3} parent=5 // pred_fallthru
      _
    %p474 = scmp.lt.s32.totalorder %s23, 2
    // Predicated region
    $region77: #{scnet_down_forward.3} parent=5 // pred_check
      %p475 = pneg %p474
    $region78: #{scnet_down_forward.3} parent=5 // pred_check_branch
      %477 = sbr.rel (%p475) target = $region80
    $region79: #{scnet_down_forward.3} parent=5 // pred_region
      // Predicated region
      $region81: #{scnet_down_forward.3} parent=79 // pred_check
        %p478 = pneg %p43
      $region82: #{scnet_down_forward.3} parent=79 // pred_check_branch
        %480 = sbr.rel (%p478) target = $region84
      $region83: #{scnet_down_forward.3} parent=79 // pred_region
        %p481 = scmp.lt.s32.totalorder %s23, 1
        %s482 = scalar_select %p481, %s23, 1
        %s483 = smul.addr %s482, 8
        %s484 = scalar_lea.vmem %s0, %s483
      $region84: #{scnet_down_forward.3} parent=79 // pred_fallthru
        _
    $region80: #{scnet_down_forward.3} parent=5 // pred_fallthru
      _
    %p485 = scmp.le.s32.totalorder 1, %s23
    %p486 = scmp.lt.s32.totalorder %s23, 3
    %p487 = pnand %p485, %p486
    %p488 = pneg %p487
    // Predicated region
    $region85: #{scnet_down_forward.3} parent=5 // pred_check
      _
    $region86: #{scnet_down_forward.3} parent=5 // pred_check_branch
      %490 = sbr.rel (%p487) target = $region88
    $region87: #{scnet_down_forward.3} parent=5 // pred_region
      %s491 = ssub.s32 %s23, 1
      %p492 = scmp.lt.s32.totalorder %s28, 1
      %s493 = scalar_select %p492, %s28, 1
      %s494 = smul.addr %s493, 8
      %s495 = scalar_lea.vmem %s0, %s494
      %p496 = pneg %p49
      %p497 = pneg %p46
      %p498 = pneg %p70
      %p499 = pneg %p67
      %p500 = pneg %p91
      %p501 = pneg %p88
      %p502 = pneg %p112
      %p503 = pneg %p109
      %p504 = pneg %p133
      %p505 = pneg %p130
      %p506 = pneg %p154
      %p507 = pneg %p151
      %p508 = pneg %p175
      %p509 = pneg %p172
      %p510 = pneg %p196
      %p511 = pneg %p193
      %p512 = pneg %p217
      %p513 = pneg %p214
      %p514 = pneg %p238
      %p515 = pneg %p235
      %p516 = pneg %p259
      %p517 = pneg %p256
      %p518 = pneg %p280
      %p519 = pneg %p277
      %p520 = pneg %p301
      %p521 = pneg %p298
      %p522 = pneg %p322
      %p523 = pneg %p319
      %p524 = pneg %p343
      %p525 = pneg %p340
      %p526 = pneg %p364
      %p527 = pneg %p361
      %p528 = pneg %p385
      %p529 = pneg %p382
      %p530 = pneg %p411
      %p531 = pneg %p408
      %p532 = scmp.lt.s32.totalorder %s28, 1
      %s533 = scalar_select %p532, %s28, 1
      %s534 = smul.addr %s533, 8
      %s535 = scalar_lea.vmem %s17, %s534
      %p536 = scmp.lt.s32.totalorder %s28, 1
      %s537 = scalar_select %p536, %s28, 1
      %s538 = smul.addr %s537, 8
      %s539 = scalar_lea.vmem %s0, %s538
      %p540 = scmp.lt.s32.totalorder %s28, 1
      %s541 = scalar_select %p540, %s28, 1
      %s542 = smul.addr %s541, 8
      %s543 = scalar_lea.vmem %s17, %s542
      %v545 = vld [vmem:[%s539] sm:$0xff]
      %v546 = vpack.c.bf16 %v545, %v545
      %v547 = vld [vmem:[%s1] sm:$0x3]
      %v548 = vld [vmem:[%s2] sm:$0xf]
      %550 = vset.pattern.permute.xlu0 0
      %551 = vperm.xlu0 %550, %v548
      %v552 = vpop.permute.xlu0 %551
      %vm554 = vcmask 64512
      %v556 = vsel %vm554, %v547, 0
      %vm558 = vcmask 1043456
      %v560 = vsel %vm558, %v546, 0
      %562 = vmatprep.subr.bf16.mxu0 0
      %563 = vmatpush1.bf16.msra.mxu0 0
      %564 = vmatprep.subr.bf16.mxu0 0
      %565 = vmatpush1.bf16.msra.mxu0 0
      %566 = vmatprep.subr.bf16.mxu0 0
      %567 = vmatpush1.bf16.msra.mxu0 0
      %568 = vmatprep.subr.bf16.mxu0 0
      %569 = vmatpush1.bf16.msra.mxu0 0
      %570 = vmatprep.subr.bf16.mxu0 0
      %571 = vmatpush1.bf16.msra.mxu0 0
      %572 = vmatprep.subr.bf16.mxu0 0
      %573 = vmatpush1.bf16.msra.mxu0 0
      %574 = vmatprep.subr.bf16.mxu0 0
      %575 = vmatpush1.bf16.msra.mxu0 0
      %576 = vmatprep.subr.bf16.mxu0 0
      %577 = vmatpush1.bf16.msra.mxu0 %v560
      %578 = vmatprep.subr.bf16.mxu0 0
      %579 = vmatpush2.bf16.msra.mxu0 0
      %580 = vmatprep.subr.bf16.mxu0 0
      %581 = vmatpush2.bf16.msra.mxu0 0
      %582 = vmatprep.subr.bf16.mxu0 0
      %583 = vmatpush2.bf16.msra.mxu0 0
      %584 = vmatprep.subr.bf16.mxu0 0
      %585 = vmatpush2.bf16.msra.mxu0 0
      %586 = vmatprep.subr.bf16.mxu0 0
      %587 = vmatpush2.bf16.msra.mxu0 0
      %588 = vmatprep.subr.bf16.mxu0 0
      %589 = vmatpush2.bf16.msra.mxu0 0
      %590 = vmatprep.subr.bf16.mxu0 0
      %591 = vmatpush2.bf16.msra.mxu0 0
      %592 = vmatprep.subr.bf16.mxu0 0
      %593 = vmatpush2.bf16.msra.mxu0 0
      %594 = vmatprep.mubr.bf16.mxu0 0
      %595 = vmatmul.mubr.bf16.gmra.mxu0 %v556
      %v596 = vpop.f32.mrf.mxu0
      %v597 = vadd.f32 %v552, %v596
      %v598 = vpop.f32.mrf.mxu0
      %v599 = vpop.f32.mrf.mxu0
      %v600 = vpop.f32.mrf.mxu0
      %601 = vdwg.mxu0
      %v602 = vmax.f32 %v597, 0.0
      %v603 = vld [vmem:[%s3] sm:$0x3]
      %v604 = vld [vmem:[%s4] sm:$0xf]
      %606 = vset.pattern.permute.xlu0 0
      %607 = vperm.xlu0 %606, %v604
      %v608 = vpop.permute.xlu0 %607
      %v611 = vsel %vm554, %v603, 0
      %613 = vmatprep.subr.bf16.mxu0 0
      %614 = vmatpush1.bf16.msra.mxu0 0
      %615 = vmatprep.subr.bf16.mxu0 0
      %616 = vmatpush1.bf16.msra.mxu0 0
      %617 = vmatprep.subr.bf16.mxu0 0
      %618 = vmatpush1.bf16.msra.mxu0 0
      %619 = vmatprep.subr.bf16.mxu0 0
      %620 = vmatpush1.bf16.msra.mxu0 0
      %621 = vmatprep.subr.bf16.mxu0 0
      %622 = vmatpush1.bf16.msra.mxu0 0
      %623 = vmatprep.subr.bf16.mxu0 0
      %624 = vmatpush1.bf16.msra.mxu0 0
      %625 = vmatprep.subr.bf16.mxu0 0
      %626 = vmatpush1.bf16.msra.mxu0 0
      %627 = vmatprep.subr.bf16.mxu0 0
      %628 = vmatpush1.bf16.msra.mxu0 %v560
      %629 = vmatprep.subr.bf16.mxu0 0
      %630 = vmatpush2.bf16.msra.mxu0 0
      %631 = vmatprep.subr.bf16.mxu0 0
      %632 = vmatpush2.bf16.msra.mxu0 0
      %633 = vmatprep.subr.bf16.mxu0 0
      %634 = vmatpush2.bf16.msra.mxu0 0
      %635 = vmatprep.subr.bf16.mxu0 0
      %636 = vmatpush2.bf16.msra.mxu0 0
      %637 = vmatprep.subr.bf16.mxu0 0
      %638 = vmatpush2.bf16.msra.mxu0 0
      %639 = vmatprep.subr.bf16.mxu0 0
      %640 = vmatpush2.bf16.msra.mxu0 0
      %641 = vmatprep.subr.bf16.mxu0 0
      %642 = vmatpush2.bf16.msra.mxu0 0
      %643 = vmatprep.subr.bf16.mxu0 0
      %644 = vmatpush2.bf16.msra.mxu0 0
      %645 = vmatprep.mubr.bf16.mxu0 0
      %646 = vmatmul.mubr.bf16.gmra.mxu0 %v611
      %v647 = vpop.f32.mrf.mxu0
      %v648 = vadd.f32 %v608, %v647
      %v649 = vpop.f32.mrf.mxu0
      %v650 = vpop.f32.mrf.mxu0
      %v651 = vpop.f32.mrf.mxu0
      %652 = vdwg.mxu0
      %v653 = vmax.f32 %v648, 0.0
      %v654 = vld [vmem:[%s5] sm:$0x3]
      %v655 = vld [vmem:[%s6] sm:$0xf]
      %v656 = vlaneseq
      %v657 = vand.u32 %v656, 127
      %v658 = vand.u32 %v657, 7
      %660 = vrot.lane.b32.xlu0 %v602, 9
      %v661 = vpop.permute.xlu0 %660
      %vm663 = vcmask 72704
      %v664 = vsel %vm663, 0.0, %v661
      %vm665 = vcmp.ge.s32.totalorder %v658, 1
      %v666 = vsel %vm665, %v664, 0.0
      %667 = vrot.lane.b32.xlu0 %v602, 8
      %v668 = vpop.permute.xlu0 %667
      %v670 = vsel %vm554, 0.0, %v668
      %671 = vrot.lane.b32.xlu0 %v602, 7
      %v672 = vpop.permute.xlu0 %671
      %vm674 = vcmask 56320
      %v675 = vsel %vm674, 0.0, %v672
      %vm676 = vcmp.le.s32.totalorder %v658, 6
      %v677 = vsel %vm676, %v675, 0.0
      %678 = vrot.lane.b32.xlu0 %v602, 1
      %v679 = vpop.permute.xlu0 %678
      %vm681 = vcmask 7168
      %v682 = vsel %vm681, 0.0, %v679
      %v683 = vsel %vm665, %v682, 0.0
      %684 = vrot.lane.b32.xlu0 %v602, 127
      %v685 = vpop.permute.xlu0 %684
      %vm687 = vcmask 515072
      %v688 = vsel %vm687, %v685, 0.0
      %v689 = vsel %vm676, %v688, 0.0
      %690 = vrot.lane.b32.xlu0 %v602, 121
      %v691 = vpop.permute.xlu0 %690
      %vm693 = vcmask 465920
      %v694 = vsel %vm693, %v691, 0.0
      %v695 = vsel %vm665, %v694, 0.0
      %696 = vrot.lane.b32.xlu0 %v602, 120
      %v697 = vpop.permute.xlu0 %696
      %vm699 = vcmask 457728
      %v700 = vsel %vm699, %v697, 0.0
      %701 = vrot.lane.b32.xlu0 %v602, 119
      %v702 = vpop.permute.xlu0 %701
      %vm704 = vcmask 449536
      %v705 = vsel %vm704, %v702, 0.0
      %v706 = vsel %vm676, %v705, 0.0
      %v708 = vrot.slane %v670, 4
      %v711 = vrot.slane %v683, 4
      %v714 = vrot.slane %v689, 4
      %v717 = vrot.slane %v700, 4
      %v719 = vsel %vm558, %v666, %v708
      %v720 = vsel %vm558, %v677, %v711
      %v721 = vsel %vm558, %v602, %v714
      %v722 = vsel %vm558, %v695, %v717
      %v723 = vpack.c.bf16 %v720, %v719
      %v724 = vpack.c.bf16 %v722, %v721
      %v725 = vpack.c.bf16 %v706, %v706
      %727 = vset.pattern.permute.xlu0 0
      %728 = vperm.xlu0 %727, %v655
      %v729 = vpop.permute.xlu0 %728
      %vm731 = vcmask 293888
      %v733 = vsel %vm731, %v654, 0
      %vm735 = vcmask 1041408
      %v737 = vsel %vm735, %v725, 0
      %739 = vmatprep.subr.bf16.mxu0 0
      %740 = vmatpush1.bf16.msra.mxu0 0
      %741 = vmatprep.subr.bf16.mxu0 0
      %742 = vmatpush1.bf16.msra.mxu0 0
      %743 = vmatprep.subr.bf16.mxu0 0
      %744 = vmatpush1.bf16.msra.mxu0 0
      %745 = vmatprep.subr.bf16.mxu0 0
      %746 = vmatpush1.bf16.msra.mxu0 0
      %747 = vmatprep.subr.bf16.mxu0 0
      %748 = vmatpush1.bf16.msra.mxu0 0
      %749 = vmatprep.subr.bf16.mxu0 0
      %750 = vmatpush1.bf16.msra.mxu0 %v737
      %751 = vmatprep.subr.bf16.mxu0 0
      %752 = vmatpush1.bf16.msra.mxu0 %v724
      %753 = vmatprep.subr.bf16.mxu0 0
      %754 = vmatpush1.bf16.msra.mxu0 %v723
      %755 = vmatprep.subr.bf16.mxu0 0
      %756 = vmatpush2.bf16.msra.mxu0 0
      %757 = vmatprep.subr.bf16.mxu0 0
      %758 = vmatpush2.bf16.msra.mxu0 0
      %759 = vmatprep.subr.bf16.mxu0 0
      %760 = vmatpush2.bf16.msra.mxu0 0
      %761 = vmatprep.subr.bf16.mxu0 0
      %762 = vmatpush2.bf16.msra.mxu0 0
      %763 = vmatprep.subr.bf16.mxu0 0
      %764 = vmatpush2.bf16.msra.mxu0 0
      %765 = vmatprep.subr.bf16.mxu0 0
      %766 = vmatpush2.bf16.msra.mxu0 0
      %767 = vmatprep.subr.bf16.mxu0 0
      %768 = vmatpush2.bf16.msra.mxu0 0
      %769 = vmatprep.subr.bf16.mxu0 0
      %770 = vmatpush2.bf16.msra.mxu0 0
      %771 = vmatprep.mubr.bf16.mxu0 0
      %772 = vmatmul.mubr.bf16.gmra.mxu0 %v733
      %v773 = vpop.f32.mrf.mxu0
      %v774 = vadd.f32 %v729, %v773
      %v775 = vpop.f32.mrf.mxu0
      %v776 = vpop.f32.mrf.mxu0
      %v777 = vpop.f32.mrf.mxu0
      %778 = vdwg.mxu0
      %v779 = vmax.f32 %v774, 0.0
      %v780 = vpack.c.bf16 %v653, %v653
      %v781 = vld [vmem:[%s15] sm:$0xf]
      %v782 = vld [vmem:[%s15 + $0x4] sm:$0xf]
      %v783 = vld [vmem:[%s15 + $0x8] sm:$0xf]
      %v784 = vld [vmem:[%s15 + $0xc] sm:$0xf]
      %v785 = vld [vmem:[%s15 + $0x10] sm:$0xf]
      %v786 = vld [vmem:[%s15 + $0x14] sm:$0xf]
      %v787 = vld [vmem:[%s15 + $0x18] sm:$0xf]
      %v788 = vld [vmem:[%s15 + $0x1c] sm:$0xf]
      %v797 = vunpack.c.l.b16 %v781
      %v798 = vunpack.c.l.b16 %v782
      %v799 = vunpack.c.l.b16 %v783
      %v800 = vunpack.c.l.b16 %v784
      %v801 = vunpack.c.l.b16 %v785
      %v802 = vunpack.c.l.b16 %v786
      %v803 = vunpack.c.l.b16 %v787
      %v804 = vunpack.c.l.b16 %v788
      %v805 = vpack.c.b16 %v798, %v797
      %v806 = vpack.c.b16 %v800, %v799
      %v807 = vpack.c.b16 %v802, %v801
      %v808 = vpack.c.b16 %v804, %v803
      %vm813 = vcmask 523264
      %v815 = vsel %vm813, %v780, 0
      %817 = vmatprep.subr.bf16.mxu0 0
      %818 = vmatpush1.bf16.msra.mxu0 0
      %819 = vmatprep.subr.bf16.mxu0 0
      %820 = vmatpush1.bf16.msra.mxu0 0
      %821 = vmatprep.subr.bf16.mxu0 0
      %822 = vmatpush1.bf16.msra.mxu0 0
      %823 = vmatprep.subr.bf16.mxu0 0
      %824 = vmatpush1.bf16.msra.mxu0 0
      %825 = vmatprep.subr.bf16.mxu0 0
      %826 = vmatpush1.bf16.msra.mxu0 %v808
      %827 = vmatprep.subr.bf16.mxu0 0
      %828 = vmatpush1.bf16.msra.mxu0 %v807
      %829 = vmatprep.subr.bf16.mxu0 0
      %830 = vmatpush1.bf16.msra.mxu0 %v806
      %831 = vmatprep.subr.bf16.mxu0 0
      %832 = vmatpush1.bf16.msra.mxu0 %v805
      %833 = vmatprep.subr.bf16.mxu0 0
      %834 = vmatpush2.bf16.msra.mxu0 0
      %835 = vmatprep.subr.bf16.mxu0 0
      %836 = vmatpush2.bf16.msra.mxu0 0
      %837 = vmatprep.subr.bf16.mxu0 0
      %838 = vmatpush2.bf16.msra.mxu0 0
      %839 = vmatprep.subr.bf16.mxu0 0
      %840 = vmatpush2.bf16.msra.mxu0 0
      %841 = vmatprep.subr.bf16.mxu0 0
      %842 = vmatpush2.bf16.msra.mxu0 0
      %843 = vmatprep.subr.bf16.mxu0 0
      %844 = vmatpush2.bf16.msra.mxu0 0
      %845 = vmatprep.subr.bf16.mxu0 0
      %846 = vmatpush2.bf16.msra.mxu0 0
      %847 = vmatprep.subr.bf16.mxu0 0
      %848 = vmatpush2.bf16.msra.mxu0 0
      %849 = vmatprep.mubr.bf16.mxu0 0
      %850 = vmatmul.mubr.bf16.gmra.mxu0 %v815
      %v851 = vpop.f32.mrf.mxu0
      %v852 = vadd.f32 0.0, %v851
      %v853 = vpop.f32.mrf.mxu0
      %v854 = vpop.f32.mrf.mxu0
      %v855 = vpop.f32.mrf.mxu0
      %856 = vdwg.mxu0
      %v857 = vld [vmem:[%s7] sm:$0x3]
      %v858 = vld [vmem:[%s8] sm:$0xf]
      %v859 = vand.u32 %v657, 1
      %861 = vrot.lane.b32.xlu0 %v852, 3
      %v862 = vpop.permute.xlu0 %861
      %vm864 = vcmask 23552
      %v865 = vsel %vm864, 0.0, %v862
      %vm866 = vcmp.ge.s32.totalorder %v859, 1
      %v867 = vsel %vm866, %v865, 0.0
      %868 = vrot.lane.b32.xlu0 %v852, 2
      %v869 = vpop.permute.xlu0 %868
      %vm871 = vcmask 15360
      %v872 = vsel %vm871, 0.0, %v869
      %873 = vrot.lane.b32.xlu0 %v852, 1
      %v874 = vpop.permute.xlu0 %873
      %v876 = vsel %vm681, 0.0, %v874
      %vm877 = vcmp.le.s32.totalorder %v859, 0
      %v878 = vsel %vm877, %v876, 0.0
      %v879 = vsel %vm866, %v876, 0.0
      %880 = vrot.lane.b32.xlu0 %v852, 127
      %v881 = vpop.permute.xlu0 %880
      %v883 = vsel %vm864, %v881, 0.0
      %v884 = vsel %vm877, %v883, 0.0
      %v885 = vsel %vm866, %v883, 0.0
      %886 = vrot.lane.b32.xlu0 %v852, 126
      %v887 = vpop.permute.xlu0 %886
      %v889 = vsel %vm871, %v887, 0.0
      %890 = vrot.lane.b32.xlu0 %v852, 125
      %v891 = vpop.permute.xlu0 %890
      %v893 = vsel %vm681, %v891, 0.0
      %v894 = vsel %vm877, %v893, 0.0
      %v896 = vrot.slane %v872, 4
      %v899 = vrot.slane %v879, 4
      %v902 = vrot.slane %v884, 4
      %v905 = vrot.slane %v889, 4
      %v907 = vsel %vm558, %v867, %v896
      %v908 = vsel %vm558, %v878, %v899
      %v909 = vsel %vm558, %v852, %v902
      %v910 = vsel %vm558, %v885, %v905
      %v911 = vpack.c.bf16 %v908, %v907
      %v912 = vpack.c.bf16 %v910, %v909
      %v913 = vpack.c.bf16 %v894, %v894
      %915 = vset.pattern.permute.xlu0 0
      %916 = vperm.xlu0 %915, %v858
      %v917 = vpop.permute.xlu0 %916
      %v920 = vsel %vm731, %v857, 0
      %v923 = vsel %vm735, %v913, 0
      %925 = vmatprep.subr.bf16.mxu0 0
      %926 = vmatpush1.bf16.msra.mxu0 0
      %927 = vmatprep.subr.bf16.mxu0 0
      %928 = vmatpush1.bf16.msra.mxu0 0
      %929 = vmatprep.subr.bf16.mxu0 0
      %930 = vmatpush1.bf16.msra.mxu0 0
      %931 = vmatprep.subr.bf16.mxu0 0
      %932 = vmatpush1.bf16.msra.mxu0 0
      %933 = vmatprep.subr.bf16.mxu0 0
      %934 = vmatpush1.bf16.msra.mxu0 0
      %935 = vmatprep.subr.bf16.mxu0 0
      %936 = vmatpush1.bf16.msra.mxu0 %v923
      %937 = vmatprep.subr.bf16.mxu0 0
      %938 = vmatpush1.bf16.msra.mxu0 %v912
      %939 = vmatprep.subr.bf16.mxu0 0
      %940 = vmatpush1.bf16.msra.mxu0 %v911
      %941 = vmatprep.subr.bf16.mxu0 0
      %942 = vmatpush2.bf16.msra.mxu0 0
      %943 = vmatprep.subr.bf16.mxu0 0
      %944 = vmatpush2.bf16.msra.mxu0 0
      %945 = vmatprep.subr.bf16.mxu0 0
      %946 = vmatpush2.bf16.msra.mxu0 0
      %947 = vmatprep.subr.bf16.mxu0 0
      %948 = vmatpush2.bf16.msra.mxu0 0
      %949 = vmatprep.subr.bf16.mxu0 0
      %950 = vmatpush2.bf16.msra.mxu0 0
      %951 = vmatprep.subr.bf16.mxu0 0
      %952 = vmatpush2.bf16.msra.mxu0 0
      %953 = vmatprep.subr.bf16.mxu0 0
      %954 = vmatpush2.bf16.msra.mxu0 0
      %955 = vmatprep.subr.bf16.mxu0 0
      %956 = vmatpush2.bf16.msra.mxu0 0
      %957 = vmatprep.mubr.bf16.mxu0 0
      %958 = vmatmul.mubr.bf16.gmra.mxu0 %v920
      %v959 = vpop.f32.mrf.mxu0
      %v960 = vadd.f32 %v917, %v959
      %v961 = vpop.f32.mrf.mxu0
      %v962 = vpop.f32.mrf.mxu0
      %v963 = vpop.f32.mrf.mxu0
      %964 = vdwg.mxu0
      %v965 = vpack.c.bf16 %v960, %v960
      %v966 = vld [vmem:[%s16] sm:$0x3]
      %vm967 = vcmask 31744
      %v969 = vsel %vm967, %v965, 0
      %v972 = vsel %vm735, %v966, 0
      %974 = vmatprep.subr.bf16.mxu0 0
      %975 = vmatpush1.bf16.msra.mxu0 0
      %976 = vmatprep.subr.bf16.mxu0 0
      %977 = vmatpush1.bf16.msra.mxu0 0
      %978 = vmatprep.subr.bf16.mxu0 0
      %979 = vmatpush1.bf16.msra.mxu0 0
      %980 = vmatprep.subr.bf16.mxu0 0
      %981 = vmatpush1.bf16.msra.mxu0 0
      %982 = vmatprep.subr.bf16.mxu0 0
      %983 = vmatpush1.bf16.msra.mxu0 0
      %984 = vmatprep.subr.bf16.mxu0 0
      %985 = vmatpush1.bf16.msra.mxu0 0
      %986 = vmatprep.subr.bf16.mxu0 0
      %987 = vmatpush1.bf16.msra.mxu0 0
      %988 = vmatprep.subr.bf16.mxu0 0
      %989 = vmatpush1.bf16.msra.mxu0 %v972
      %990 = vmatprep.subr.bf16.mxu0 0
      %991 = vmatpush2.bf16.msra.mxu0 0
      %992 = vmatprep.subr.bf16.mxu0 0
      %993 = vmatpush2.bf16.msra.mxu0 0
      %994 = vmatprep.subr.bf16.mxu0 0
      %995 = vmatpush2.bf16.msra.mxu0 0
      %996 = vmatprep.subr.bf16.mxu0 0
      %997 = vmatpush2.bf16.msra.mxu0 0
      %998 = vmatprep.subr.bf16.mxu0 0
      %999 = vmatpush2.bf16.msra.mxu0 0
      %1000 = vmatprep.subr.bf16.mxu0 0
      %1001 = vmatpush2.bf16.msra.mxu0 0
      %1002 = vmatprep.subr.bf16.mxu0 0
      %1003 = vmatpush2.bf16.msra.mxu0 0
      %1004 = vmatprep.subr.bf16.mxu0 0
      %1005 = vmatpush2.bf16.msra.mxu0 0
      %1006 = vmatprep.mubr.bf16.mxu0 0
      %1007 = vmatmul.mubr.bf16.gmra.mxu0 %v969
      %v1008 = vpop.f32.mrf.mxu0
      %v1009 = vadd.f32 0.0, %v1008
      %v1010 = vpop.f32.mrf.mxu0
      %v1011 = vpop.f32.mrf.mxu0
      %v1012 = vpop.f32.mrf.mxu0
      %1013 = vdwg.mxu0
      %v1014 = vld [vmem:[%s9] sm:$0x3]
      %v1015 = vld [vmem:[%s10] sm:$0xf]
      %1017 = vrot.lane.b32.xlu0 %v653, 9
      %v1018 = vpop.permute.xlu0 %1017
      %v1020 = vsel %vm663, 0.0, %v1018
      %v1021 = vsel %vm665, %v1020, 0.0
      %1022 = vrot.lane.b32.xlu0 %v653, 8
      %v1023 = vpop.permute.xlu0 %1022
      %v1025 = vsel %vm554, 0.0, %v1023
      %1026 = vrot.lane.b32.xlu0 %v653, 7
      %v1027 = vpop.permute.xlu0 %1026
      %v1029 = vsel %vm674, 0.0, %v1027
      %v1030 = vsel %vm676, %v1029, 0.0
      %1031 = vrot.lane.b32.xlu0 %v653, 1
      %v1032 = vpop.permute.xlu0 %1031
      %v1034 = vsel %vm681, 0.0, %v1032
      %v1035 = vsel %vm665, %v1034, 0.0
      %1036 = vrot.lane.b32.xlu0 %v653, 127
      %v1037 = vpop.permute.xlu0 %1036
      %v1039 = vsel %vm687, %v1037, 0.0
      %v1040 = vsel %vm676, %v1039, 0.0
      %1041 = vrot.lane.b32.xlu0 %v653, 121
      %v1042 = vpop.permute.xlu0 %1041
      %v1044 = vsel %vm693, %v1042, 0.0
      %v1045 = vsel %vm665, %v1044, 0.0
      %1046 = vrot.lane.b32.xlu0 %v653, 120
      %v1047 = vpop.permute.xlu0 %1046
      %v1049 = vsel %vm699, %v1047, 0.0
      %1050 = vrot.lane.b32.xlu0 %v653, 119
      %v1051 = vpop.permute.xlu0 %1050
      %v1053 = vsel %vm704, %v1051, 0.0
      %v1054 = vsel %vm676, %v1053, 0.0
      %v1056 = vrot.slane %v1025, 4
      %v1059 = vrot.slane %v1035, 4
      %v1062 = vrot.slane %v1040, 4
      %v1065 = vrot.slane %v1049, 4
      %v1067 = vsel %vm558, %v1021, %v1056
      %v1068 = vsel %vm558, %v1030, %v1059
      %v1069 = vsel %vm558, %v653, %v1062
      %v1070 = vsel %vm558, %v1045, %v1065
      %v1071 = vpack.c.bf16 %v1068, %v1067
      %v1072 = vpack.c.bf16 %v1070, %v1069
      %v1073 = vpack.c.bf16 %v1054, %v1054
      %1075 = vset.pattern.permute.xlu0 0
      %1076 = vperm.xlu0 %1075, %v1015
      %v1077 = vpop.permute.xlu0 %1076
      %v1080 = vsel %vm731, %v1014, 0
      %v1083 = vsel %vm735, %v1073, 0
      %1085 = vmatprep.subr.bf16.mxu0 0
      %1086 = vmatpush1.bf16.msra.mxu0 0
      %1087 = vmatprep.subr.bf16.mxu0 0
      %1088 = vmatpush1.bf16.msra.mxu0 0
      %1089 = vmatprep.subr.bf16.mxu0 0
      %1090 = vmatpush1.bf16.msra.mxu0 0
      %1091 = vmatprep.subr.bf16.mxu0 0
      %1092 = vmatpush1.bf16.msra.mxu0 0
      %1093 = vmatprep.subr.bf16.mxu0 0
      %1094 = vmatpush1.bf16.msra.mxu0 0
      %1095 = vmatprep.subr.bf16.mxu0 0
      %1096 = vmatpush1.bf16.msra.mxu0 %v1083
      %1097 = vmatprep.subr.bf16.mxu0 0
      %1098 = vmatpush1.bf16.msra.mxu0 %v1072
      %1099 = vmatprep.subr.bf16.mxu0 0
      %1100 = vmatpush1.bf16.msra.mxu0 %v1071
      %1101 = vmatprep.subr.bf16.mxu0 0
      %1102 = vmatpush2.bf16.msra.mxu0 0
      %1103 = vmatprep.subr.bf16.mxu0 0
      %1104 = vmatpush2.bf16.msra.mxu0 0
      %1105 = vmatprep.subr.bf16.mxu0 0
      %1106 = vmatpush2.bf16.msra.mxu0 0
      %1107 = vmatprep.subr.bf16.mxu0 0
      %1108 = vmatpush2.bf16.msra.mxu0 0
      %1109 = vmatprep.subr.bf16.mxu0 0
      %1110 = vmatpush2.bf16.msra.mxu0 0
      %1111 = vmatprep.subr.bf16.mxu0 0
      %1112 = vmatpush2.bf16.msra.mxu0 0
      %1113 = vmatprep.subr.bf16.mxu0 0
      %1114 = vmatpush2.bf16.msra.mxu0 0
      %1115 = vmatprep.subr.bf16.mxu0 0
      %1116 = vmatpush2.bf16.msra.mxu0 0
      %1117 = vmatprep.mubr.bf16.mxu0 0
      %1118 = vmatmul.mubr.bf16.gmra.mxu0 %v1080
      %v1119 = vpop.f32.mrf.mxu0
      %v1120 = vadd.f32 %v1077, %v1119
      %v1121 = vpop.f32.mrf.mxu0
      %v1122 = vpop.f32.mrf.mxu0
      %v1123 = vpop.f32.mrf.mxu0
      %1124 = vdwg.mxu0
      %v1125 = vadd.f32 %v653, %v1009
      %v1126 = vadd.f32 %v1125, 1e-08
      %v1127 = vsub.f32 0.0, %v1126
      %v1128 = vmul.f32 %v1127, 1.442695
      %v1129 = vpow.pop %v1128
      %v1130 = vadd.f32 %v1129, 1.0
      %v1131 = vrcp.pop %v1130
      %v1132 = vmul.f32 1.0, %v1131
      %v1133 = vmul.f32 %v1120, %v1132
      %v1134 = vld [vmem:[%s11] sm:$0x3]
      %v1135 = vld [vmem:[%s12] sm:$0xf]
      %1137 = vrot.lane.b32.xlu0 %v1133, 9
      %v1138 = vpop.permute.xlu0 %1137
      %v1140 = vsel %vm663, 0.0, %v1138
      %v1141 = vsel %vm665, %v1140, 0.0
      %1142 = vrot.lane.b32.xlu0 %v1133, 8
      %v1143 = vpop.permute.xlu0 %1142
      %v1145 = vsel %vm554, 0.0, %v1143
      %1146 = vrot.lane.b32.xlu0 %v1133, 7
      %v1147 = vpop.permute.xlu0 %1146
      %v1149 = vsel %vm674, 0.0, %v1147
      %v1150 = vsel %vm676, %v1149, 0.0
      %1151 = vrot.lane.b32.xlu0 %v1133, 1
      %v1152 = vpop.permute.xlu0 %1151
      %v1154 = vsel %vm681, 0.0, %v1152
      %v1155 = vsel %vm665, %v1154, 0.0
      %1156 = vrot.lane.b32.xlu0 %v1133, 127
      %v1157 = vpop.permute.xlu0 %1156
      %v1159 = vsel %vm687, %v1157, 0.0
      %v1160 = vsel %vm676, %v1159, 0.0
      %1161 = vrot.lane.b32.xlu0 %v1133, 121
      %v1162 = vpop.permute.xlu0 %1161
      %v1164 = vsel %vm693, %v1162, 0.0
      %v1165 = vsel %vm665, %v1164, 0.0
      %1166 = vrot.lane.b32.xlu0 %v1133, 120
      %v1167 = vpop.permute.xlu0 %1166
      %v1169 = vsel %vm699, %v1167, 0.0
      %1170 = vrot.lane.b32.xlu0 %v1133, 119
      %v1171 = vpop.permute.xlu0 %1170
      %v1173 = vsel %vm704, %v1171, 0.0
      %v1174 = vsel %vm676, %v1173, 0.0
      %v1176 = vrot.slane %v1145, 4
      %v1179 = vrot.slane %v1155, 4
      %v1182 = vrot.slane %v1160, 4
      %v1185 = vrot.slane %v1169, 4
      %v1187 = vsel %vm558, %v1141, %v1176
      %v1188 = vsel %vm558, %v1150, %v1179
      %v1189 = vsel %vm558, %v1133, %v1182
      %v1190 = vsel %vm558, %v1165, %v1185
      %v1191 = vpack.c.bf16 %v1188, %v1187
      %v1192 = vpack.c.bf16 %v1190, %v1189
      %v1193 = vpack.c.bf16 %v1174, %v1174
      %1195 = vset.pattern.permute.xlu0 0
      %1196 = vperm.xlu0 %1195, %v1135
      %v1197 = vpop.permute.xlu0 %1196
      %v1200 = vsel %vm731, %v1134, 0
      %v1203 = vsel %vm735, %v1193, 0
      %1205 = vmatprep.subr.bf16.mxu0 0
      %1206 = vmatpush1.bf16.msra.mxu0 0
      %1207 = vmatprep.subr.bf16.mxu0 0
      %1208 = vmatpush1.bf16.msra.mxu0 0
      %1209 = vmatprep.subr.bf16.mxu0 0
      %1210 = vmatpush1.bf16.msra.mxu0 0
      %1211 = vmatprep.subr.bf16.mxu0 0
      %1212 = vmatpush1.bf16.msra.mxu0 0
      %1213 = vmatprep.subr.bf16.mxu0 0
      %1214 = vmatpush1.bf16.msra.mxu0 0
      %1215 = vmatprep.subr.bf16.mxu0 0
      %1216 = vmatpush1.bf16.msra.mxu0 %v1203
      %1217 = vmatprep.subr.bf16.mxu0 0
      %1218 = vmatpush1.bf16.msra.mxu0 %v1192
      %1219 = vmatprep.subr.bf16.mxu0 0
      %1220 = vmatpush1.bf16.msra.mxu0 %v1191
      %1221 = vmatprep.subr.bf16.mxu0 0
      %1222 = vmatpush2.bf16.msra.mxu0 0
      %1223 = vmatprep.subr.bf16.mxu0 0
      %1224 = vmatpush2.bf16.msra.mxu0 0
      %1225 = vmatprep.subr.bf16.mxu0 0
      %1226 = vmatpush2.bf16.msra.mxu0 0
      %1227 = vmatprep.subr.bf16.mxu0 0
      %1228 = vmatpush2.bf16.msra.mxu0 0
      %1229 = vmatprep.subr.bf16.mxu0 0
      %1230 = vmatpush2.bf16.msra.mxu0 0
      %1231 = vmatprep.subr.bf16.mxu0 0
      %1232 = vmatpush2.bf16.msra.mxu0 0
      %1233 = vmatprep.subr.bf16.mxu0 0
      %1234 = vmatpush2.bf16.msra.mxu0 0
      %1235 = vmatprep.subr.bf16.mxu0 0
      %1236 = vmatpush2.bf16.msra.mxu0 0
      %1237 = vmatprep.mubr.bf16.mxu0 0
      %1238 = vmatmul.mubr.bf16.gmra.mxu0 %v1200
      %v1239 = vpop.f32.mrf.mxu0
      %v1240 = vadd.f32 %v1197, %v1239
      %v1241 = vpop.f32.mrf.mxu0
      %v1242 = vpop.f32.mrf.mxu0
      %v1243 = vpop.f32.mrf.mxu0
      %1244 = vdwg.mxu0
      %v1245 = vmax.f32 %v1240, 0.0
      %v1247 = vrot.slane %v1245, 4
      %v1249 = vsel %vm558, %v779, %v1247
      %v1250 = vpack.c.bf16 %v1249, %v1249
      %v1251 = vld [vmem:[%s13] sm:$0xf]
      %v1252 = vld [vmem:[%s14] sm:$0xff]
      %1254 = vset.pattern.permute.xlu0 0
      %1255 = vperm.xlu0 %1254, %v1252
      %v1256 = vpop.permute.xlu0 %1255
      %v1259 = vsel %vm554, %v1251, 0
      %v1262 = vsel %vm558, %v1250, 0
      %1264 = vmatprep.subr.bf16.mxu0 0
      %1265 = vmatpush1.bf16.msra.mxu0 0
      %1266 = vmatprep.subr.bf16.mxu0 0
      %1267 = vmatpush1.bf16.msra.mxu0 0
      %1268 = vmatprep.subr.bf16.mxu0 0
      %1269 = vmatpush1.bf16.msra.mxu0 0
      %1270 = vmatprep.subr.bf16.mxu0 0
      %1271 = vmatpush1.bf16.msra.mxu0 0
      %1272 = vmatprep.subr.bf16.mxu0 0
      %1273 = vmatpush1.bf16.msra.mxu0 0
      %1274 = vmatprep.subr.bf16.mxu0 0
      %1275 = vmatpush1.bf16.msra.mxu0 0
      %1276 = vmatprep.subr.bf16.mxu0 0
      %1277 = vmatpush1.bf16.msra.mxu0 0
      %1278 = vmatprep.subr.bf16.mxu0 0
      %1279 = vmatpush1.bf16.msra.mxu0 %v1262
      %1280 = vmatprep.subr.bf16.mxu0 0
      %1281 = vmatpush2.bf16.msra.mxu0 0
      %1282 = vmatprep.subr.bf16.mxu0 0
      %1283 = vmatpush2.bf16.msra.mxu0 0
      %1284 = vmatprep.subr.bf16.mxu0 0
      %1285 = vmatpush2.bf16.msra.mxu0 0
      %1286 = vmatprep.subr.bf16.mxu0 0
      %1287 = vmatpush2.bf16.msra.mxu0 0
      %1288 = vmatprep.subr.bf16.mxu0 0
      %1289 = vmatpush2.bf16.msra.mxu0 0
      %1290 = vmatprep.subr.bf16.mxu0 0
      %1291 = vmatpush2.bf16.msra.mxu0 0
      %1292 = vmatprep.subr.bf16.mxu0 0
      %1293 = vmatpush2.bf16.msra.mxu0 0
      %1294 = vmatprep.subr.bf16.mxu0 0
      %1295 = vmatpush2.bf16.msra.mxu0 0
      %1296 = vmatprep.mubr.bf16.mxu0 0
      %1297 = vmatmul.mubr.bf16.gmra.mxu0 %v1259
      %v1298 = vpop.f32.mrf.mxu0
      %v1299 = vadd.f32 %v1256, %v1298
      %v1300 = vpop.f32.mrf.mxu0
      %v1301 = vpop.f32.mrf.mxu0
      %v1302 = vpop.f32.mrf.mxu0
      %1303 = vdwg.mxu0
      %v1304 = vadd.f32 %v1299, %v545
      %v1305 = vmax.f32 %v1304, 0.0
      %1306 = vst.msk [vmem:[%s543] sm:$0xff] %vm813, %v1305
      %p1307 = scmp.lt.s32.totalorder %s28, 1
      %s1308 = scalar_select %p1307, %s28, 1
      %s1309 = smul.addr %s1308, 8
      %s1310 = scalar_lea.vmem %s17, %s1309
      // Predicated region
      $region89: #{scnet_down_forward.3} parent=87 // pred_check
        %p1311 = pneg %p408
      $region90: #{scnet_down_forward.3} parent=87 // pred_check_branch
        %1313 = sbr.rel (%p1311) target = $region92
      $region91: #{scnet_down_forward.3} parent=87 // pred_region
        _
      $region92: #{scnet_down_forward.3} parent=87 // pred_fallthru
        _
    $region88: #{scnet_down_forward.3} parent=5 // pred_fallthru
      _
    %p1314 = scmp.le.s32.totalorder 2, %s23
    // Predicated region
    $region93: #{scnet_down_forward.3} parent=5 // pred_check
      %p1315 = pneg %p1314
    $region94: #{scnet_down_forward.3} parent=5 // pred_check_branch
      %1317 = sbr.rel (%p1315) target = $region96
    $region95: #{scnet_down_forward.3} parent=5 // pred_region
      %s1318 = ssub.s32 %s23, 2
      // Predicated region
      $region97: #{scnet_down_forward.3} parent=95 // pred_check
        %p1319 = pneg %p414
      $region98: #{scnet_down_forward.3} parent=95 // pred_check_branch
        %1321 = sbr.rel (%p1319) target = $region100
      $region99: #{scnet_down_forward.3} parent=95 // pred_region
        %p1322 = scmp.lt.s32.totalorder %s29, 1
        %s1323 = scalar_select %p1322, %s29, 1
        %s1324 = smul.addr %s1323, 8
        %s1325 = scalar_lea.vmem %s17, %s1324
      $region100: #{scnet_down_forward.3} parent=95 // pred_fallthru
        _
    $region96: #{scnet_down_forward.3} parent=5 // pred_fallthru
      _
  $region6: #{scnet_down_forward.3} parent=0 // loop_footer
    %s27 = sadd.s32 1, %s23
  $region7: #{scnet_down_forward.3} parent=0 // loop_footer_branch
    %22 = sbr.rel target = $region3
  $region8: #{scnet_down_forward.3} parent=0 // loop_exit
    _

</llo_original>
